<compile_context>
chip_gen: v5e
topology: v5e:2x2
jax: 0.10.0
libtpu: 0.0.40
codegen_flags: <defaults>
</compile_context>

<pallas_src>
import math

import jax
import jax.numpy as jnp
from jax import lax
from jax.experimental import pallas as pl
from jax.experimental.pallas import tpu as pltpu


_INV_SQRT2 = 1.0 / math.sqrt(2.0)


def _gelu_exact(x):
    # Matches torch.nn.GELU() default (erf-based, not tanh approximation).
    return 0.5 * x * (1.0 + lax.erf(x * _INV_SQRT2))


def _round_up(x, m):
    return ((x + m - 1) // m) * m


def _pad2d(a, rows, cols):
    pr, pc = rows - a.shape[0], cols - a.shape[1]
    if pr or pc:
        a = jnp.pad(a, ((0, pr), (0, pc)))
    return a


def mlp_kernel(x_ref, w1_ref, b1_ref, w2_ref, b2_ref, o_ref):
    # fc1: (tm, D) @ (D, H) on the MXU, bf16 inputs, f32 accumulation.
    h = jnp.dot(x_ref[...], w1_ref[...], preferred_element_type=jnp.float32)
    h = h + b1_ref[...]          # f32 bias add (VPU)
    h = _gelu_exact(h)           # exact GELU in f32 (matches torch.nn.GELU())
    # drop1: p=0.0 -> identity (inference semantics)
    # fc2: (tm, H) @ (H, D_out) on the MXU.
    o = jnp.dot(h.astype(w2_ref.dtype), w2_ref[...],
                preferred_element_type=jnp.float32)
    o = o + b2_ref[...]
    # drop2: p=0.0 -> identity
    o_ref[...] = o.astype(o_ref.dtype)


def mlp_pallas(x, w1, b1, w2, b2, *, tile_m=256, matmul_dtype=jnp.bfloat16):
    """x: (B, N, D_in); w1: (D_in, H); b1: (H,); w2: (H, D_out); b2: (D_out,)."""
    B, N, D_in = x.shape
    H = w1.shape[1]
    D_out = w2.shape[1]
    out_dtype = x.dtype

    # bf16 sublane packing requires a row-tile multiple of 16.
    assert tile_m % 16 == 0, "tile_m must be a multiple of 16 for bf16 tiles"

    # Pad the token axis to a multiple of tile_m and every feature dim to a
    # multiple of 128 (lane-dense). Zero padding is exact: padded input
    # columns / hidden units / output columns contribute nothing, and padded
    # rows are sliced off at the end.
    M = B * N
    M_p = _round_up(M, tile_m)
    D_in_p = _round_up(D_in, 128)
    H_p = _round_up(H, 128)
    D_out_p = _round_up(D_out, 128)

    x2d = _pad2d(x.reshape(M, D_in).astype(matmul_dtype), M_p, D_in_p)
    w1_p = _pad2d(w1.astype(matmul_dtype), D_in_p, H_p)
    w2_p = _pad2d(w2.astype(matmul_dtype), H_p, D_out_p)
    b1_p = _pad2d(b1.reshape(1, H).astype(jnp.float32), 1, H_p)
    b2_p = _pad2d(b2.reshape(1, D_out).astype(jnp.float32), 1, D_out_p)

    grid_m = M_p // tile_m

    # Weight-stationary: W1/W2/b1/b2 have constant index_maps, so Mosaic keeps
    # them resident in VMEM across the whole grid (no per-step re-DMA).
    # TODO(synk): for large H (W1+W2 > ~48 MiB bf16) add a second "arbitrary"
    # grid axis over H with a f32 VMEM accumulator (pl.when init/finalize)
    # instead of keeping both weight matrices fully resident, so real ViT
    # MLPs also fit v7x's 64 MiB VMEM.
    mm_bytes = jnp.dtype(matmul_dtype).itemsize
    flops = 2 * M_p * (D_in_p * H_p + H_p * D_out_p)
    bytes_accessed = (M_p * D_in_p * mm_bytes
                      + D_in_p * H_p * mm_bytes
                      + H_p * D_out_p * mm_bytes
                      + 4 * (H_p + D_out_p)
                      + M_p * D_out_p * jnp.dtype(out_dtype).itemsize)

    out2d = pl.pallas_call(
        mlp_kernel,
        out_shape=jax.ShapeDtypeStruct((M_p, D_out_p), out_dtype),
        grid_spec=pltpu.PrefetchScalarGridSpec(
            num_scalar_prefetch=0,
            grid=(grid_m,),
            in_specs=[
                pl.BlockSpec((tile_m, D_in_p), lambda i: (i, 0)),   # x tile
                pl.BlockSpec((D_in_p, H_p), lambda i: (0, 0)),      # W1 (resident)
                pl.BlockSpec((1, H_p), lambda i: (0, 0)),           # b1
                pl.BlockSpec((H_p, D_out_p), lambda i: (0, 0)),     # W2 (resident)
                pl.BlockSpec((1, D_out_p), lambda i: (0, 0)),       # b2
            ],
            out_specs=pl.BlockSpec((tile_m, D_out_p), lambda i: (i, 0)),
        ),
        compiler_params=pltpu.CompilerParams(
            dimension_semantics=("parallel",),
            # Above the 16/32 MiB scoped defaults, below v7x's 64 MiB physical.
            vmem_limit_bytes=60 * 1024 * 1024,
        ),
        cost_estimate=pl.CostEstimate(
            flops=flops,
            transcendentals=M_p * H_p,
            bytes_accessed=bytes_accessed,
        ),
    )(x2d, w1_p, b1_p, w2_p, b2_p)

    return out2d[:M, :D_out].reshape(B, N, D_out)


def init_mlp_params(key, in_features, hidden_features, out_features, dtype=jnp.float32):
    """Deterministic init mimicking nn.Linear (uniform(-1/sqrt(fan_in), 1/sqrt(fan_in)))."""
    k1, k2, k3, k4 = jax.random.split(key, 4)
    bound1 = 1.0 / math.sqrt(in_features)
    bound2 = 1.0 / math.sqrt(hidden_features)
    # Stored already transposed to (in, out) layout for the kernel.
    w1 = jax.random.uniform(k1, (in_features, hidden_features), dtype,
                            minval=-bound1, maxval=bound1)
    b1 = jax.random.uniform(k2, (hidden_features,), dtype,
                            minval=-bound1, maxval=bound1)
    w2 = jax.random.uniform(k3, (hidden_features, out_features), dtype,
                            minval=-bound2, maxval=bound2)
    b2 = jax.random.uniform(k4, (out_features,), dtype,
                            minval=-bound2, maxval=bound2)
    return w1, b1, w2, b2


def mlp_ref(x, w1, b1, w2, b2, matmul_dtype=jnp.float32):
    """Pure-JAX reference matching the PyTorch forward (drop=0.0)."""
    xc = x.astype(matmul_dtype)
    h = jnp.einsum("bnd,dh->bnh", xc, w1.astype(matmul_dtype),
                   preferred_element_type=jnp.float32) + b1.astype(jnp.float32)
    h = _gelu_exact(h)
    o = jnp.einsum("bnh,hd->bnd", h.astype(matmul_dtype), w2.astype(matmul_dtype),
                   preferred_element_type=jnp.float32) + b2.astype(jnp.float32)
    return o.astype(x.dtype)


if __name__ == "__main__":
    key = jax.random.PRNGKey(0)
    k_x, k_p = jax.random.split(key)

    B, N = 2, 8            # batch, tokens
    in_features = 32
    hidden_features = 64   # ViT-style MLP expansion (small for the example)
    out_features = in_features

    x = jax.random.normal(k_x, (B, N, in_features), dtype=jnp.float32)
    w1, b1, w2, b2 = init_mlp_params(k_p, in_features, hidden_features, out_features)

    out = mlp_pallas(x, w1, b1, w2, b2, tile_m=256)
    out = jax.block_until_ready(out)

    assert out.shape == (B, N, out_features)

    # Matched-precision reference (bf16 MXU inputs, f32 accumulation): tight check.
    ref_bf16 = mlp_ref(x, w1, b1, w2, b2, matmul_dtype=jnp.bfloat16)
    assert jnp.allclose(out, ref_bf16, atol=2e-3, rtol=2e-3), "mismatch vs bf16 reference"

    # Full-f32 reference: loose sanity check (bf16 rounding of x/W1/W2).
    ref_f32 = mlp_ref(x, w1, b1, w2, b2, matmul_dtype=jnp.float32)
    assert jnp.allclose(out, ref_f32, atol=5e-2, rtol=5e-2), "mismatch vs f32 reference"

    print("KERNEL_OK")
</pallas_src>

<mosaic_0001>
module attributes {stable_mosaic.version = 11 : i64} {
  func.func @mlp_kernel(%arg0: i32, %arg1: memref<256x128xbf16, #tpu.memory_space<vmem>>, %arg2: memref<128x128xbf16, #tpu.memory_space<vmem>>, %arg3: memref<1x128xf32, #tpu.memory_space<vmem>>, %arg4: memref<128x128xbf16, #tpu.memory_space<vmem>>, %arg5: memref<1x128xf32, #tpu.memory_space<vmem>>, %arg6: memref<256x128xf32, #tpu.memory_space<vmem>>) attributes {dimension_semantics = [#tpu.dimension_semantics<parallel>], iteration_bounds = array<i64: 1>, scalar_prefetch = 0 : i64, scratch_operands = 0 : i64, tpu.core_type = #tpu.core_type<tc>, window_params = [{transform_indices = @transform_0, window_bounds = array<i64: 256, 128>}, {pipeline_mode = #tpu.pipeline_mode<synchronous>, transform_indices = @transform_1, window_bounds = array<i64: 128, 128>}, {pipeline_mode = #tpu.pipeline_mode<synchronous>, transform_indices = @transform_2, window_bounds = array<i64: 1, 128>}, {pipeline_mode = #tpu.pipeline_mode<synchronous>, transform_indices = @transform_3, window_bounds = array<i64: 128, 128>}, {pipeline_mode = #tpu.pipeline_mode<synchronous>, transform_indices = @transform_4, window_bounds = array<i64: 1, 128>}, {transform_indices = @transform_5, window_bounds = array<i64: 256, 128>}]} {
    %c0 = arith.constant 0 : index
    %c0_0 = arith.constant 0 : index
    %0 = vector.load %arg1[%c0, %c0_0] : memref<256x128xbf16, #tpu.memory_space<vmem>>, vector<256x128xbf16>
    %c0_1 = arith.constant 0 : index
    %c0_2 = arith.constant 0 : index
    %1 = vector.load %arg2[%c0_1, %c0_2] : memref<128x128xbf16, #tpu.memory_space<vmem>>, vector<128x128xbf16>
    %cst = arith.constant dense<0.000000e+00> : vector<256x128xf32>
    %2 = tpu.matmul %0, %1, %cst {dimension_numbers = #tpu.dot_dimension_numbers<[1], [0], [0], [1], [0, 0, 1, 1], [], []>} : vector<256x128xbf16>, vector<128x128xbf16>, vector<256x128xf32> -> vector<256x128xf32>
    %c0_3 = arith.constant 0 : index
    %c0_4 = arith.constant 0 : index
    %3 = vector.load %arg3[%c0_3, %c0_4] : memref<1x128xf32, #tpu.memory_space<vmem>>, vector<1x128xf32>
    %4 = vector.broadcast %3 : vector<1x128xf32> to vector<256x128xf32>
    %5 = arith.addf %2, %4 : vector<256x128xf32>
    %cst_5 = arith.constant 5.000000e-01 : f32
    %6 = vector.broadcast %cst_5 : f32 to vector<256x128xf32>
    %7 = arith.mulf %6, %5 : vector<256x128xf32>
    %cst_6 = arith.constant 0.707106769 : f32
    %8 = vector.broadcast %cst_6 : f32 to vector<256x128xf32>
    %9 = arith.mulf %5, %8 : vector<256x128xf32>
    %10 = math.erf %9 : vector<256x128xf32>
    %cst_7 = arith.constant 1.000000e+00 : f32
    %11 = vector.broadcast %cst_7 : f32 to vector<256x128xf32>
    %12 = arith.addf %11, %10 : vector<256x128xf32>
    %13 = arith.mulf %7, %12 : vector<256x128xf32>
    %14 = arith.truncf %13 : vector<256x128xf32> to vector<256x128xbf16>
    %c0_8 = arith.constant 0 : index
    %c0_9 = arith.constant 0 : index
    %15 = vector.load %arg4[%c0_8, %c0_9] : memref<128x128xbf16, #tpu.memory_space<vmem>>, vector<128x128xbf16>
    %cst_10 = arith.constant dense<0.000000e+00> : vector<256x128xf32>
    %16 = tpu.matmul %14, %15, %cst_10 {dimension_numbers = #tpu.dot_dimension_numbers<[1], [0], [0], [1], [0, 0, 1, 1], [], []>} : vector<256x128xbf16>, vector<128x128xbf16>, vector<256x128xf32> -> vector<256x128xf32>
    %c0_11 = arith.constant 0 : index
    %c0_12 = arith.constant 0 : index
    %17 = vector.load %arg5[%c0_11, %c0_12] : memref<1x128xf32, #tpu.memory_space<vmem>>, vector<1x128xf32>
    %18 = vector.broadcast %17 : vector<1x128xf32> to vector<256x128xf32>
    %19 = arith.addf %16, %18 : vector<256x128xf32>
    %c0_13 = arith.constant 0 : index
    %c0_14 = arith.constant 0 : index
    %20 = vector.load %arg6[%c0_13, %c0_14] : memref<256x128xf32, #tpu.memory_space<vmem>>, vector<256x128xf32>
    tpu.vector_store %arg6[%c0_13, %c0_14], %19 {strides = array<i32>} : memref<256x128xf32, #tpu.memory_space<vmem>>, vector<256x128xf32>,
    return
  }
  func.func @transform_0(%arg0: i32) -> (i32, i32) {
    %c0_i32 = arith.constant 0 : i32
    %c0_i32_0 = arith.constant 0 : i32
    return %arg0, %c0_i32 : i32, i32
  }
  func.func @transform_1(%arg0: i32) -> (i32, i32) {
    %c0_i32 = arith.constant 0 : i32
    %c0_i32_0 = arith.constant 0 : i32
    %c0_i32_1 = arith.constant 0 : i32
    return %c0_i32, %c0_i32_0 : i32, i32
  }
  func.func @transform_2(%arg0: i32) -> (i32, i32) {
    %c0_i32 = arith.constant 0 : i32
    %c0_i32_0 = arith.constant 0 : i32
    %c0_i32_1 = arith.constant 0 : i32
    return %c0_i32, %c0_i32_0 : i32, i32
  }
  func.func @transform_3(%arg0: i32) -> (i32, i32) {
    %c0_i32 = arith.constant 0 : i32
    %c0_i32_0 = arith.constant 0 : i32
    %c0_i32_1 = arith.constant 0 : i32
    return %c0_i32, %c0_i32_0 : i32, i32
  }
  func.func @transform_4(%arg0: i32) -> (i32, i32) {
    %c0_i32 = arith.constant 0 : i32
    %c0_i32_0 = arith.constant 0 : i32
    %c0_i32_1 = arith.constant 0 : i32
    return %c0_i32, %c0_i32_0 : i32, i32
  }
  func.func @transform_5(%arg0: i32) -> (i32, i32) {
    %c0_i32 = arith.constant 0 : i32
    %c0_i32_0 = arith.constant 0 : i32
    return %arg0, %c0_i32 : i32, i32
  }
}

</mosaic_0001>

<llo_original>
// kernel: tpu_custom_call.1
$region0: #{tpu_custom_call.1}
  #allocation0 [shape = 'u32[]', space=smem, size = 0x4, offset = 0x4, fixed_abs, tag = 'smem constant byte address 0x4 - core index']
  #allocation1 [shape = 'u32[72,128]{1,0:T(1,128)}', space=vmem, size = 0x9000, scoped, tag = 'internal scratch']
  %s0 = inlined_call_operand.hbm [shape: bf16[256,128], index: 0, kind: input, shape index: {}]
  %s1 = inlined_call_operand.hbm [shape: bf16[128,128], index: 1, kind: input, shape index: {}]
  %s2 = inlined_call_operand.vmem [shape: f32[1,128], index: 2, kind: input, shape index: {}]
  %s3 = inlined_call_operand.hbm [shape: bf16[128,128], index: 3, kind: input, shape index: {}]
  %s4 = inlined_call_operand.vmem [shape: f32[1,128], index: 4, kind: input, shape index: {}]
  %s5 = inlined_call_operand.hbm [shape: f32[256,128], index: 5, kind: output, shape index: {}]
  %s6 = sld [smem:[#allocation0]]
  $region42: #{tpu_custom_call.1} parent=0
    _
  %s8 = ssub.s32 1, %s6
  %s9 = scalar_select 0, %s8, %s6
  $region1: #{tpu_custom_call.1} parent=0
    #allocation2 [shape = 'u8[65536]{0}', space=vmem, size = 0x10000, scoped, tag = 'input window, operand 0, single buffered']
    #allocation3 [shape = 's32[1]{0}', space=sflag, size = 0x4, scoped, tag = 'scoped memory for tpu_custom_call.1']
    #allocation4 [shape = 's32[1]{0}', space=sflag, size = 0x4, scoped, tag = 'scoped memory for tpu_custom_call.1']
    #allocation5 [shape = 'u8[32768]{0}', space=vmem, size = 0x8000, scoped, tag = 'input window, operand 1, single buffered']
    #allocation6 [shape = 's32[1]{0}', space=sflag, size = 0x4, scoped, tag = 'scoped memory for tpu_custom_call.1']
    #allocation7 [shape = 'u8[32768]{0}', space=vmem, size = 0x8000, scoped, tag = 'input window, operand 3, single buffered']
    #allocation8 [shape = 'u8[131072]{0}', space=vmem, size = 0x20000, scoped, tag = 'output window, operand 0, single buffered']
    %10 = vsyncpa [#allocation3], 0
    %11 = vsyncpa [#allocation6], 0
    %12 = vsyncpa [#allocation4], 0
    // Predicated region
    $region2: #{tpu_custom_call.1} parent=1 // pred_check
      _
    $region3: #{tpu_custom_call.1} parent=1 // pred_check_branch
      %14 = sbr.rel (0) target = $region5
    $region4: #{tpu_custom_call.1} parent=1 // pred_region
      %16 = vsyncadd [#allocation3], 0
      %s17 = sshll.u32 %s0, 4
      %s18 = int_to_ptr.hbm [resolvable:$true] %s17
      %s19 = sshll.u32 [#allocation2], 4
      %s20 = int_to_ptr.vmem [resolvable:$true] %s19
      %25 = dma.hbm_to_vmem [thread:$0]  %s18, 2048, %s20, [#allocation3], 64, 64, 4
    $region5: #{tpu_custom_call.1} parent=1 // pred_fallthru
      _
    // Predicated region
    $region6: #{tpu_custom_call.1} parent=1 // pred_check
      _
    $region7: #{tpu_custom_call.1} parent=1 // pred_check_branch
      %27 = sbr.rel (0) target = $region9
    $region8: #{tpu_custom_call.1} parent=1 // pred_region
      %29 = vsyncadd [#allocation6], 0
      %s30 = sshll.u32 %s1, 4
      %s31 = int_to_ptr.hbm [resolvable:$true] %s30
      %s32 = sshll.u32 [#allocation5], 4
      %s33 = int_to_ptr.vmem [resolvable:$true] %s32
      %38 = dma.hbm_to_vmem [thread:$0]  %s31, 1024, %s33, [#allocation6], 64, 64, 4
    $region9: #{tpu_custom_call.1} parent=1 // pred_fallthru
      _
    // Predicated region
    $region10: #{tpu_custom_call.1} parent=1 // pred_check
      _
    $region11: #{tpu_custom_call.1} parent=1 // pred_check_branch
      %40 = sbr.rel (0) target = $region13
    $region12: #{tpu_custom_call.1} parent=1 // pred_region
      _
    $region13: #{tpu_custom_call.1} parent=1 // pred_fallthru
      _
    // Predicated region
    $region14: #{tpu_custom_call.1} parent=1 // pred_check
      _
    $region15: #{tpu_custom_call.1} parent=1 // pred_check_branch
      %42 = sbr.rel (0) target = $region17
    $region16: #{tpu_custom_call.1} parent=1 // pred_region
      %44 = vsyncadd [#allocation6], 0
      %s45 = sshll.u32 %s3, 4
      %s46 = int_to_ptr.hbm [resolvable:$true] %s45
      %s47 = sshll.u32 [#allocation7], 4
      %s48 = int_to_ptr.vmem [resolvable:$true] %s47
      %53 = dma.hbm_to_vmem [thread:$0]  %s46, 1024, %s48, [#allocation6], 64, 64, 4
    $region17: #{tpu_custom_call.1} parent=1 // pred_fallthru
      _
    // Predicated region
    $region18: #{tpu_custom_call.1} parent=1 // pred_check
      _
    $region19: #{tpu_custom_call.1} parent=1 // pred_check_branch
      %55 = sbr.rel (0) target = $region21
    $region20: #{tpu_custom_call.1} parent=1 // pred_region
      _
    $region21: #{tpu_custom_call.1} parent=1 // pred_fallthru
      _
    // Predicated region
    $region22: #{tpu_custom_call.1} parent=1 // pred_check
      _
    $region23: #{tpu_custom_call.1} parent=1 // pred_check_branch
      %57 = sbr.rel (0) target = $region25
    $region24: #{tpu_custom_call.1} parent=1 // pred_region
      %59 = dma.done [#allocation3], 2048
    $region25: #{tpu_custom_call.1} parent=1 // pred_fallthru
      _
    // Predicated region
    $region26: #{tpu_custom_call.1} parent=1 // pred_check
      _
    $region27: #{tpu_custom_call.1} parent=1 // pred_check_branch
      %61 = sbr.rel (0) target = $region29
    $region28: #{tpu_custom_call.1} parent=1 // pred_region
      %63 = dma.done [#allocation6], 1024
    $region29: #{tpu_custom_call.1} parent=1 // pred_fallthru
      _
    // Predicated region
    $region30: #{tpu_custom_call.1} parent=1 // pred_check
      _
    $region31: #{tpu_custom_call.1} parent=1 // pred_check_branch
      %65 = sbr.rel (0) target = $region33
    $region32: #{tpu_custom_call.1} parent=1 // pred_region
      %67 = dma.done [#allocation6], 1024
    $region33: #{tpu_custom_call.1} parent=1 // pred_fallthru
      _
    %v68 = vld [vmem:[#allocation2] sm:$0xf]
    %v69 = vld [vmem:[#allocation2 + $0x4] sm:$0xf]
    %v70 = vld [vmem:[#allocation2 + $0x8] sm:$0xf]
    %v71 = vld [vmem:[#allocation2 + $0xc] sm:$0xf]
    %v72 = vld [vmem:[#allocation2 + $0x10] sm:$0xf]
    %v73 = vld [vmem:[#allocation2 + $0x14] sm:$0xf]
    %v74 = vld [vmem:[#allocation2 + $0x18] sm:$0xf]
    %v75 = vld [vmem:[#allocation2 + $0x1c] sm:$0xf]
    %v76 = vld [vmem:[#allocation2 + $0x20] sm:$0xf]
    %v77 = vld [vmem:[#allocation2 + $0x24] sm:$0xf]
    %v78 = vld [vmem:[#allocation2 + $0x28] sm:$0xf]
    %v79 = vld [vmem:[#allocation2 + $0x2c] sm:$0xf]
    %v80 = vld [vmem:[#allocation2 + $0x30] sm:$0xf]
    %v81 = vld [vmem:[#allocation2 + $0x34] sm:$0xf]
    %v82 = vld [vmem:[#allocation2 + $0x38] sm:$0xf]
    %v83 = vld [vmem:[#allocation2 + $0x3c] sm:$0xf]
    %v84 = vld [vmem:[#allocation2 + $0x40] sm:$0xf]
    %v85 = vld [vmem:[#allocation2 + $0x44] sm:$0xf]
    %v86 = vld [vmem:[#allocation2 + $0x48] sm:$0xf]
    %v87 = vld [vmem:[#allocation2 + $0x4c] sm:$0xf]
    %v88 = vld [vmem:[#allocation2 + $0x50] sm:$0xf]
    %v89 = vld [vmem:[#allocation2 + $0x54] sm:$0xf]
    %v90 = vld [vmem:[#allocation2 + $0x58] sm:$0xf]
    %v91 = vld [vmem:[#allocation2 + $0x5c] sm:$0xf]
    %v92 = vld [vmem:[#allocation2 + $0x60] sm:$0xf]
    %v93 = vld [vmem:[#allocation2 + $0x64] sm:$0xf]
    %v94 = vld [vmem:[#allocation2 + $0x68] sm:$0xf]
    %v95 = vld [vmem:[#allocation2 + $0x6c] sm:$0xf]
    %v96 = vld [vmem:[#allocation2 + $0x70] sm:$0xf]
    %v97 = vld [vmem:[#allocation2 + $0x74] sm:$0xf]
    %v98 = vld [vmem:[#allocation2 + $0x78] sm:$0xf]
    %v99 = vld [vmem:[#allocation2 + $0x7c] sm:$0xf]
    %v100 = vld [vmem:[#allocation5] sm:$0xf]
    %v101 = vld [vmem:[#allocation5 + $0x4] sm:$0xf]
    %v102 = vld [vmem:[#allocation5 + $0x8] sm:$0xf]
    %v103 = vld [vmem:[#allocation5 + $0xc] sm:$0xf]
    %v104 = vld [vmem:[#allocation5 + $0x10] sm:$0xf]
    %v105 = vld [vmem:[#allocation5 + $0x14] sm:$0xf]
    %v106 = vld [vmem:[#allocation5 + $0x18] sm:$0xf]
    %v107 = vld [vmem:[#allocation5 + $0x1c] sm:$0xf]
    %v108 = vld [vmem:[#allocation5 + $0x20] sm:$0xf]
    %v109 = vld [vmem:[#allocation5 + $0x24] sm:$0xf]
    %v110 = vld [vmem:[#allocation5 + $0x28] sm:$0xf]
    %v111 = vld [vmem:[#allocation5 + $0x2c] sm:$0xf]
    %v112 = vld [vmem:[#allocation5 + $0x30] sm:$0xf]
    %v113 = vld [vmem:[#allocation5 + $0x34] sm:$0xf]
    %v114 = vld [vmem:[#allocation5 + $0x38] sm:$0xf]
    %v115 = vld [vmem:[#allocation5 + $0x3c] sm:$0xf]
    %v116 = vld [vmem:[%s2] sm:$0x1]
    %v118 = vperm.slane %v116, 0
    %v152 = vunpack.c.l.b16 %v68
    %v153 = vunpack.c.l.b16 %v69
    %v154 = vunpack.c.l.b16 %v70
    %v155 = vunpack.c.l.b16 %v71
    %v156 = vunpack.c.l.b16 %v72
    %v157 = vunpack.c.l.b16 %v73
    %v158 = vunpack.c.l.b16 %v74
    %v159 = vunpack.c.l.b16 %v75
    %v160 = vunpack.c.l.b16 %v76
    %v161 = vunpack.c.l.b16 %v77
    %v162 = vunpack.c.l.b16 %v78
    %v163 = vunpack.c.l.b16 %v79
    %v164 = vunpack.c.l.b16 %v80
    %v165 = vunpack.c.l.b16 %v81
    %v166 = vunpack.c.l.b16 %v82
    %v167 = vunpack.c.l.b16 %v83
    %v168 = vunpack.c.l.b16 %v84
    %v169 = vunpack.c.l.b16 %v85
    %v170 = vunpack.c.l.b16 %v86
    %v171 = vunpack.c.l.b16 %v87
    %v172 = vunpack.c.l.b16 %v88
    %v173 = vunpack.c.l.b16 %v89
    %v174 = vunpack.c.l.b16 %v90
    %v175 = vunpack.c.l.b16 %v91
    %v176 = vunpack.c.l.b16 %v92
    %v177 = vunpack.c.l.b16 %v93
    %v178 = vunpack.c.l.b16 %v94
    %v179 = vunpack.c.l.b16 %v95
    %v180 = vunpack.c.l.b16 %v96
    %v181 = vunpack.c.l.b16 %v97
    %v182 = vunpack.c.l.b16 %v98
    %v183 = vunpack.c.l.b16 %v99
    %v184 = vpack.c.b16 %v153, %v152
    %v185 = vpack.c.b16 %v155, %v154
    %v186 = vpack.c.b16 %v157, %v156
    %v187 = vpack.c.b16 %v159, %v158
    %v188 = vpack.c.b16 %v161, %v160
    %v189 = vpack.c.b16 %v163, %v162
    %v190 = vpack.c.b16 %v165, %v164
    %v191 = vpack.c.b16 %v167, %v166
    %v192 = vpack.c.b16 %v169, %v168
    %v193 = vpack.c.b16 %v171, %v170
    %v194 = vpack.c.b16 %v173, %v172
    %v195 = vpack.c.b16 %v175, %v174
    %v196 = vpack.c.b16 %v177, %v176
    %v197 = vpack.c.b16 %v179, %v178
    %v198 = vpack.c.b16 %v181, %v180
    %v199 = vpack.c.b16 %v183, %v182
    %v232 = vunpack.c.l.b16 %v100
    %v233 = vunpack.c.l.b16 %v101
    %v234 = vunpack.c.l.b16 %v102
    %v235 = vunpack.c.l.b16 %v103
    %v236 = vunpack.c.l.b16 %v104
    %v237 = vunpack.c.l.b16 %v105
    %v238 = vunpack.c.l.b16 %v106
    %v239 = vunpack.c.l.b16 %v107
    %v240 = vunpack.c.l.b16 %v108
    %v241 = vunpack.c.l.b16 %v109
    %v242 = vunpack.c.l.b16 %v110
    %v243 = vunpack.c.l.b16 %v111
    %v244 = vunpack.c.l.b16 %v112
    %v245 = vunpack.c.l.b16 %v113
    %v246 = vunpack.c.l.b16 %v114
    %v247 = vunpack.c.l.b16 %v115
    %v248 = vpack.c.b16 %v233, %v232
    %v249 = vpack.c.b16 %v235, %v234
    %v250 = vpack.c.b16 %v237, %v236
    %v251 = vpack.c.b16 %v239, %v238
    %v252 = vpack.c.b16 %v241, %v240
    %v253 = vpack.c.b16 %v243, %v242
    %v254 = vpack.c.b16 %v245, %v244
    %v255 = vpack.c.b16 %v247, %v246
    %264 = vmatpush.bf16.msra.mxu0 %v255
    %265 = vmatpush.bf16.msra.mxu0 %v254
    %266 = vmatpush.bf16.msra.mxu0 %v253
    %267 = vmatpush.bf16.msra.mxu0 %v252
    %268 = vmatpush.bf16.msra.mxu0 %v251
    %269 = vmatpush.bf16.msra.mxu0 %v250
    %270 = vmatpush.bf16.msra.mxu0 %v249
    %271 = vmatpush.bf16.msra.mxu0 %v248
    %272 = vmatmul.bf16.gmra.mxu0 %v184
    %v273 = vpop.f32.mrf.mxu0
    %v274 = vadd.f32 %v118, %v273
    %v275 = vpop.f32.mrf.mxu0
    %v276 = vadd.f32 %v118, %v275
    %277 = vmatmul.bf16.gmra.mxu0 %v185
    %v278 = vpop.f32.mrf.mxu0
    %v279 = vadd.f32 %v118, %v278
    %v280 = vpop.f32.mrf.mxu0
    %v281 = vadd.f32 %v118, %v280
    %282 = vmatmul.bf16.gmra.mxu0 %v186
    %v283 = vpop.f32.mrf.mxu0
    %v284 = vadd.f32 %v118, %v283
    %v285 = vpop.f32.mrf.mxu0
    %v286 = vadd.f32 %v118, %v285
    %287 = vmatmul.bf16.gmra.mxu0 %v187
    %v288 = vpop.f32.mrf.mxu0
    %v289 = vadd.f32 %v118, %v288
    %v290 = vpop.f32.mrf.mxu0
    %v291 = vadd.f32 %v118, %v290
    %292 = vmatmul.bf16.gmra.mxu0 %v188
    %v293 = vpop.f32.mrf.mxu0
    %v294 = vadd.f32 %v118, %v293
    %v295 = vpop.f32.mrf.mxu0
    %v296 = vadd.f32 %v118, %v295
    %297 = vmatmul.bf16.gmra.mxu0 %v189
    %v298 = vpop.f32.mrf.mxu0
    %v299 = vadd.f32 %v118, %v298
    %v300 = vpop.f32.mrf.mxu0
    %v301 = vadd.f32 %v118, %v300
    %302 = vmatmul.bf16.gmra.mxu0 %v190
    %v303 = vpop.f32.mrf.mxu0
    %v304 = vadd.f32 %v118, %v303
    %v305 = vpop.f32.mrf.mxu0
    %v306 = vadd.f32 %v118, %v305
    %307 = vmatmul.bf16.gmra.mxu0 %v191
    %v308 = vpop.f32.mrf.mxu0
    %v309 = vadd.f32 %v118, %v308
    %v310 = vpop.f32.mrf.mxu0
    %v311 = vadd.f32 %v118, %v310
    %312 = vmatmul.bf16.gmra.mxu0 %v192
    %v313 = vpop.f32.mrf.mxu0
    %v314 = vadd.f32 %v118, %v313
    %v315 = vpop.f32.mrf.mxu0
    %v316 = vadd.f32 %v118, %v315
    %317 = vmatmul.bf16.gmra.mxu0 %v193
    %v318 = vpop.f32.mrf.mxu0
    %v319 = vadd.f32 %v118, %v318
    %v320 = vpop.f32.mrf.mxu0
    %v321 = vadd.f32 %v118, %v320
    %322 = vmatmul.bf16.gmra.mxu0 %v194
    %v323 = vpop.f32.mrf.mxu0
    %v324 = vadd.f32 %v118, %v323
    %v325 = vpop.f32.mrf.mxu0
    %v326 = vadd.f32 %v118, %v325
    %327 = vmatmul.bf16.gmra.mxu0 %v195
    %v328 = vpop.f32.mrf.mxu0
    %v329 = vadd.f32 %v118, %v328
    %v330 = vpop.f32.mrf.mxu0
    %v331 = vadd.f32 %v118, %v330
    %332 = vmatmul.bf16.gmra.mxu0 %v196
    %v333 = vpop.f32.mrf.mxu0
    %v334 = vadd.f32 %v118, %v333
    %v335 = vpop.f32.mrf.mxu0
    %v336 = vadd.f32 %v118, %v335
    %337 = vmatmul.bf16.gmra.mxu0 %v197
    %v338 = vpop.f32.mrf.mxu0
    %v339 = vadd.f32 %v118, %v338
    %v340 = vpop.f32.mrf.mxu0
    %v341 = vadd.f32 %v118, %v340
    %342 = vmatmul.bf16.gmra.mxu0 %v198
    %v343 = vpop.f32.mrf.mxu0
    %v344 = vadd.f32 %v118, %v343
    %v345 = vpop.f32.mrf.mxu0
    %v346 = vadd.f32 %v118, %v345
    %347 = vmatmul.bf16.gmra.mxu0 %v199
    %v348 = vpop.f32.mrf.mxu0
    %v349 = vadd.f32 %v118, %v348
    %v350 = vpop.f32.mrf.mxu0
    %v351 = vadd.f32 %v118, %v350
    %352 = vdwg.mxu0
    %v353 = vmul.f32 %v274, 0.5
    %v354 = vmul.f32 %v276, 0.5
    %v355 = vmul.f32 %v279, 0.5
    %v356 = vmul.f32 %v281, 0.5
    %v357 = vmul.f32 %v284, 0.5
    %v358 = vmul.f32 %v286, 0.5
    %v359 = vmul.f32 %v289, 0.5
    %v360 = vmul.f32 %v291, 0.5
    %v361 = vmul.f32 %v294, 0.5
    %v362 = vmul.f32 %v296, 0.5
    %v363 = vmul.f32 %v299, 0.5
    %v364 = vmul.f32 %v301, 0.5
    %v365 = vmul.f32 %v304, 0.5
    %v366 = vmul.f32 %v306, 0.5
    %v367 = vmul.f32 %v309, 0.5
    %v368 = vmul.f32 %v311, 0.5
    %v369 = vmul.f32 %v314, 0.5
    %v370 = vmul.f32 %v316, 0.5
    %v371 = vmul.f32 %v319, 0.5
    %v372 = vmul.f32 %v321, 0.5
    %v373 = vmul.f32 %v324, 0.5
    %v374 = vmul.f32 %v326, 0.5
    %v375 = vmul.f32 %v329, 0.5
    %v376 = vmul.f32 %v331, 0.5
    %v377 = vmul.f32 %v334, 0.5
    %v378 = vmul.f32 %v336, 0.5
    %v379 = vmul.f32 %v339, 0.5
    %v380 = vmul.f32 %v341, 0.5
    %v381 = vmul.f32 %v344, 0.5
    %v382 = vmul.f32 %v346, 0.5
    %v383 = vmul.f32 %v349, 0.5
    %v384 = vmul.f32 %v351, 0.5
    %v385 = vmul.f32 %v274, 0.70710677
    %v386 = vmul.f32 %v276, 0.70710677
    %v387 = vmul.f32 %v279, 0.70710677
    %v388 = vmul.f32 %v281, 0.70710677
    %v389 = vmul.f32 %v284, 0.70710677
    %v390 = vmul.f32 %v286, 0.70710677
    %v391 = vmul.f32 %v289, 0.70710677
    %v392 = vmul.f32 %v291, 0.70710677
    %v393 = vmul.f32 %v294, 0.70710677
    %v394 = vmul.f32 %v296, 0.70710677
    %v395 = vmul.f32 %v299, 0.70710677
    %v396 = vmul.f32 %v301, 0.70710677
    %v397 = vmul.f32 %v304, 0.70710677
    %v398 = vmul.f32 %v306, 0.70710677
    %v399 = vmul.f32 %v309, 0.70710677
    %v400 = vmul.f32 %v311, 0.70710677
    %v401 = vmul.f32 %v314, 0.70710677
    %v402 = vmul.f32 %v316, 0.70710677
    %v403 = vmul.f32 %v319, 0.70710677
    %v404 = vmul.f32 %v321, 0.70710677
    %v405 = vmul.f32 %v324, 0.70710677
    %v406 = vmul.f32 %v326, 0.70710677
    %v407 = vmul.f32 %v329, 0.70710677
    %v408 = vmul.f32 %v331, 0.70710677
    %v409 = vmul.f32 %v334, 0.70710677
    %v410 = vmul.f32 %v336, 0.70710677
    %v411 = vmul.f32 %v339, 0.70710677
    %v412 = vmul.f32 %v341, 0.70710677
    %v413 = vmul.f32 %v344, 0.70710677
    %v414 = vmul.f32 %v346, 0.70710677
    %v415 = vmul.f32 %v349, 0.70710677
    %v416 = vmul.f32 %v351, 0.70710677
    %v417 = vmul.f32 %v385, %v385
    %v418 = vmin.f32 16.0, %v417
    %v419 = vmul.f32 %v418, 2.1237322e-06
    %v420 = vadd.f32 %v419, 0.00028619796
    %v421 = vmul.f32 %v418, %v420
    %v422 = vadd.f32 %v421, 0.0036580483
    %v423 = vmul.f32 %v418, %v422
    %v424 = vadd.f32 %v423, 0.05243302
    %v425 = vmul.f32 %v418, %v424
    %v426 = vadd.f32 %v425, 0.18741608
    %v427 = vmul.f32 %v418, %v426
    %v428 = vadd.f32 %v427, 1.1283791
    %v429 = vmul.f32 %v385, %v428
    %v430 = vmul.f32 %v418, 3.8918573e-05
    %v431 = vadd.f32 %v430, 0.001143296
    %v432 = vmul.f32 %v418, %v431
    %v433 = vadd.f32 %v432, 0.014752088
    %v434 = vmul.f32 %v418, %v433
    %v435 = vadd.f32 %v434, 0.112945676
    %v436 = vmul.f32 %v418, %v435
    %v437 = vadd.f32 %v436, 0.4994258
    %v438 = vmul.f32 %v418, %v437
    %v439 = vadd.f32 %v438, 1.0
    %v440 = vrcp.pop %v439
    %v441 = vmul.f32 %v439, %v440
    %v442 = vsub.f32 1.0, %v441
    %v443 = vmul.f32 %v440, %v442
    %v444 = vadd.f32 %v440, %v443
    %vm445 = vweird.f32 %v439
    %vm446 = vweird.f32 %v440
    %vm447 = vmor %vm445, %vm446
    %v448 = vsel %vm447, %v440, %v444
    %v449 = vand.u32 2147483647, %v439
    %vm450 = vcmp.eq.f32.partialorder %v449, 8.507059e+37
    %v451 = vand.u32 %v439, 2147483648
    %v452 = vor.u32 1.1754944e-38, %v451
    %v453 = vsel %vm450, %v452, %v448
    %v454 = vmul.f32 %v429, %v453
    %v455 = vmin.f32 %v454, 1.0
    %v456 = vmax.f32 %v455, -1.0
    %v457 = vmul.f32 %v386, %v386
    %v458 = vmin.f32 16.0, %v457
    %v459 = vmul.f32 %v458, 2.1237322e-06
    %v460 = vadd.f32 %v459, 0.00028619796
    %v461 = vmul.f32 %v458, %v460
    %v462 = vadd.f32 %v461, 0.0036580483
    %v463 = vmul.f32 %v458, %v462
    %v464 = vadd.f32 %v463, 0.05243302
    %v465 = vmul.f32 %v458, %v464
    %v466 = vadd.f32 %v465, 0.18741608
    %v467 = vmul.f32 %v458, %v466
    %v468 = vadd.f32 %v467, 1.1283791
    %v469 = vmul.f32 %v386, %v468
    %v470 = vmul.f32 %v458, 3.8918573e-05
    %v471 = vadd.f32 %v470, 0.001143296
    %v472 = vmul.f32 %v458, %v471
    %v473 = vadd.f32 %v472, 0.014752088
    %v474 = vmul.f32 %v458, %v473
    %v475 = vadd.f32 %v474, 0.112945676
    %v476 = vmul.f32 %v458, %v475
    %v477 = vadd.f32 %v476, 0.4994258
    %v478 = vmul.f32 %v458, %v477
    %v479 = vadd.f32 %v478, 1.0
    %v480 = vrcp.pop %v479
    %v481 = vmul.f32 %v479, %v480
    %v482 = vsub.f32 1.0, %v481
    %v483 = vmul.f32 %v480, %v482
    %v484 = vadd.f32 %v480, %v483
    %vm485 = vweird.f32 %v479
    %vm486 = vweird.f32 %v480
    %vm487 = vmor %vm485, %vm486
    %v488 = vsel %vm487, %v480, %v484
    %v489 = vand.u32 2147483647, %v479
    %vm490 = vcmp.eq.f32.partialorder %v489, 8.507059e+37
    %v491 = vand.u32 %v479, 2147483648
    %v492 = vor.u32 1.1754944e-38, %v491
    %v493 = vsel %vm490, %v492, %v488
    %v494 = vmul.f32 %v469, %v493
    %v495 = vmin.f32 %v494, 1.0
    %v496 = vmax.f32 %v495, -1.0
    %v497 = vmul.f32 %v387, %v387
    %v498 = vmin.f32 16.0, %v497
    %v499 = vmul.f32 %v498, 2.1237322e-06
    %v500 = vadd.f32 %v499, 0.00028619796
    %v501 = vmul.f32 %v498, %v500
    %v502 = vadd.f32 %v501, 0.0036580483
    %v503 = vmul.f32 %v498, %v502
    %v504 = vadd.f32 %v503, 0.05243302
    %v505 = vmul.f32 %v498, %v504
    %v506 = vadd.f32 %v505, 0.18741608
    %v507 = vmul.f32 %v498, %v506
    %v508 = vadd.f32 %v507, 1.1283791
    %v509 = vmul.f32 %v387, %v508
    %v510 = vmul.f32 %v498, 3.8918573e-05
    %v511 = vadd.f32 %v510, 0.001143296
    %v512 = vmul.f32 %v498, %v511
    %v513 = vadd.f32 %v512, 0.014752088
    %v514 = vmul.f32 %v498, %v513
    %v515 = vadd.f32 %v514, 0.112945676
    %v516 = vmul.f32 %v498, %v515
    %v517 = vadd.f32 %v516, 0.4994258
    %v518 = vmul.f32 %v498, %v517
    %v519 = vadd.f32 %v518, 1.0
    %v520 = vrcp.pop %v519
    %v521 = vmul.f32 %v519, %v520
    %v522 = vsub.f32 1.0, %v521
    %v523 = vmul.f32 %v520, %v522
    %v524 = vadd.f32 %v520, %v523
    %vm525 = vweird.f32 %v519
    %vm526 = vweird.f32 %v520
    %vm527 = vmor %vm525, %vm526
    %v528 = vsel %vm527, %v520, %v524
    %v529 = vand.u32 2147483647, %v519
    %vm530 = vcmp.eq.f32.partialorder %v529, 8.507059e+37
    %v531 = vand.u32 %v519, 2147483648
    %v532 = vor.u32 1.1754944e-38, %v531
    %v533 = vsel %vm530, %v532, %v528
    %v534 = vmul.f32 %v509, %v533
    %v535 = vmin.f32 %v534, 1.0
    %v536 = vmax.f32 %v535, -1.0
    %v537 = vmul.f32 %v388, %v388
    %v538 = vmin.f32 16.0, %v537
    %v539 = vmul.f32 %v538, 2.1237322e-06
    %v540 = vadd.f32 %v539, 0.00028619796
    %v541 = vmul.f32 %v538, %v540
    %v542 = vadd.f32 %v541, 0.0036580483
    %v543 = vmul.f32 %v538, %v542
    %v544 = vadd.f32 %v543, 0.05243302
    %v545 = vmul.f32 %v538, %v544
    %v546 = vadd.f32 %v545, 0.18741608
    %v547 = vmul.f32 %v538, %v546
    %v548 = vadd.f32 %v547, 1.1283791
    %v549 = vmul.f32 %v388, %v548
    %v550 = vmul.f32 %v538, 3.8918573e-05
    %v551 = vadd.f32 %v550, 0.001143296
    %v552 = vmul.f32 %v538, %v551
    %v553 = vadd.f32 %v552, 0.014752088
    %v554 = vmul.f32 %v538, %v553
    %v555 = vadd.f32 %v554, 0.112945676
    %v556 = vmul.f32 %v538, %v555
    %v557 = vadd.f32 %v556, 0.4994258
    %v558 = vmul.f32 %v538, %v557
    %v559 = vadd.f32 %v558, 1.0
    %v560 = vrcp.pop %v559
    %v561 = vmul.f32 %v559, %v560
    %v562 = vsub.f32 1.0, %v561
    %v563 = vmul.f32 %v560, %v562
    %v564 = vadd.f32 %v560, %v563
    %vm565 = vweird.f32 %v559
    %vm566 = vweird.f32 %v560
    %vm567 = vmor %vm565, %vm566
    %v568 = vsel %vm567, %v560, %v564
    %v569 = vand.u32 2147483647, %v559
    %vm570 = vcmp.eq.f32.partialorder %v569, 8.507059e+37
    %v571 = vand.u32 %v559, 2147483648
    %v572 = vor.u32 1.1754944e-38, %v571
    %v573 = vsel %vm570, %v572, %v568
    %v574 = vmul.f32 %v549, %v573
    %v575 = vmin.f32 %v574, 1.0
    %v576 = vmax.f32 %v575, -1.0
    %v577 = vmul.f32 %v389, %v389
    %v578 = vmin.f32 16.0, %v577
    %v579 = vmul.f32 %v578, 2.1237322e-06
    %v580 = vadd.f32 %v579, 0.00028619796
    %v581 = vmul.f32 %v578, %v580
    %v582 = vadd.f32 %v581, 0.0036580483
    %v583 = vmul.f32 %v578, %v582
    %v584 = vadd.f32 %v583, 0.05243302
    %v585 = vmul.f32 %v578, %v584
    %v586 = vadd.f32 %v585, 0.18741608
    %v587 = vmul.f32 %v578, %v586
    %v588 = vadd.f32 %v587, 1.1283791
    %v589 = vmul.f32 %v389, %v588
    %v590 = vmul.f32 %v578, 3.8918573e-05
    %v591 = vadd.f32 %v590, 0.001143296
    %v592 = vmul.f32 %v578, %v591
    %v593 = vadd.f32 %v592, 0.014752088
    %v594 = vmul.f32 %v578, %v593
    %v595 = vadd.f32 %v594, 0.112945676
    %v596 = vmul.f32 %v578, %v595
    %v597 = vadd.f32 %v596, 0.4994258
    %v598 = vmul.f32 %v578, %v597
    %v599 = vadd.f32 %v598, 1.0
    %v600 = vrcp.pop %v599
    %v601 = vmul.f32 %v599, %v600
    %v602 = vsub.f32 1.0, %v601
    %v603 = vmul.f32 %v600, %v602
    %v604 = vadd.f32 %v600, %v603
    %vm605 = vweird.f32 %v599
    %vm606 = vweird.f32 %v600
    %vm607 = vmor %vm605, %vm606
    %v608 = vsel %vm607, %v600, %v604
    %v609 = vand.u32 2147483647, %v599
    %vm610 = vcmp.eq.f32.partialorder %v609, 8.507059e+37
    %v611 = vand.u32 %v599, 2147483648
    %v612 = vor.u32 1.1754944e-38, %v611
    %v613 = vsel %vm610, %v612, %v608
    %v614 = vmul.f32 %v589, %v613
    %v615 = vmin.f32 %v614, 1.0
    %v616 = vmax.f32 %v615, -1.0
    %v617 = vmul.f32 %v390, %v390
    %v618 = vmin.f32 16.0, %v617
    %v619 = vmul.f32 %v618, 2.1237322e-06
    %v620 = vadd.f32 %v619, 0.00028619796
    %v621 = vmul.f32 %v618, %v620
    %v622 = vadd.f32 %v621, 0.0036580483
    %v623 = vmul.f32 %v618, %v622
    %v624 = vadd.f32 %v623, 0.05243302
    %v625 = vmul.f32 %v618, %v624
    %v626 = vadd.f32 %v625, 0.18741608
    %v627 = vmul.f32 %v618, %v626
    %v628 = vadd.f32 %v627, 1.1283791
    %v629 = vmul.f32 %v390, %v628
    %v630 = vmul.f32 %v618, 3.8918573e-05
    %v631 = vadd.f32 %v630, 0.001143296
    %v632 = vmul.f32 %v618, %v631
    %v633 = vadd.f32 %v632, 0.014752088
    %v634 = vmul.f32 %v618, %v633
    %v635 = vadd.f32 %v634, 0.112945676
    %v636 = vmul.f32 %v618, %v635
    %v637 = vadd.f32 %v636, 0.4994258
    %v638 = vmul.f32 %v618, %v637
    %v639 = vadd.f32 %v638, 1.0
    %v640 = vrcp.pop %v639
    %v641 = vmul.f32 %v639, %v640
    %v642 = vsub.f32 1.0, %v641
    %v643 = vmul.f32 %v640, %v642
    %v644 = vadd.f32 %v640, %v643
    %vm645 = vweird.f32 %v639
    %vm646 = vweird.f32 %v640
    %vm647 = vmor %vm645, %vm646
    %v648 = vsel %vm647, %v640, %v644
    %v649 = vand.u32 2147483647, %v639
    %vm650 = vcmp.eq.f32.partialorder %v649, 8.507059e+37
    %v651 = vand.u32 %v639, 2147483648
    %v652 = vor.u32 1.1754944e-38, %v651
    %v653 = vsel %vm650, %v652, %v648
    %v654 = vmul.f32 %v629, %v653
    %v655 = vmin.f32 %v654, 1.0
    %v656 = vmax.f32 %v655, -1.0
    %v657 = vmul.f32 %v391, %v391
    %v658 = vmin.f32 16.0, %v657
    %v659 = vmul.f32 %v658, 2.1237322e-06
    %v660 = vadd.f32 %v659, 0.00028619796
    %v661 = vmul.f32 %v658, %v660
    %v662 = vadd.f32 %v661, 0.0036580483
    %v663 = vmul.f32 %v658, %v662
    %v664 = vadd.f32 %v663, 0.05243302
    %v665 = vmul.f32 %v658, %v664
    %v666 = vadd.f32 %v665, 0.18741608
    %v667 = vmul.f32 %v658, %v666
    %v668 = vadd.f32 %v667, 1.1283791
    %v669 = vmul.f32 %v391, %v668
    %v670 = vmul.f32 %v658, 3.8918573e-05
    %v671 = vadd.f32 %v670, 0.001143296
    %v672 = vmul.f32 %v658, %v671
    %v673 = vadd.f32 %v672, 0.014752088
    %v674 = vmul.f32 %v658, %v673
    %v675 = vadd.f32 %v674, 0.112945676
    %v676 = vmul.f32 %v658, %v675
    %v677 = vadd.f32 %v676, 0.4994258
    %v678 = vmul.f32 %v658, %v677
    %v679 = vadd.f32 %v678, 1.0
    %v680 = vrcp.pop %v679
    %v681 = vmul.f32 %v679, %v680
    %v682 = vsub.f32 1.0, %v681
    %v683 = vmul.f32 %v680, %v682
    %v684 = vadd.f32 %v680, %v683
    %vm685 = vweird.f32 %v679
    %vm686 = vweird.f32 %v680
    %vm687 = vmor %vm685, %vm686
    %v688 = vsel %vm687, %v680, %v684
    %v689 = vand.u32 2147483647, %v679
    %vm690 = vcmp.eq.f32.partialorder %v689, 8.507059e+37
    %v691 = vand.u32 %v679, 2147483648
    %v692 = vor.u32 1.1754944e-38, %v691
    %v693 = vsel %vm690, %v692, %v688
    %v694 = vmul.f32 %v669, %v693
    %v695 = vmin.f32 %v694, 1.0
    %v696 = vmax.f32 %v695, -1.0
    %v697 = vmul.f32 %v392, %v392
    %v698 = vmin.f32 16.0, %v697
    %v699 = vmul.f32 %v698, 2.1237322e-06
    %v700 = vadd.f32 %v699, 0.00028619796
    %v701 = vmul.f32 %v698, %v700
    %v702 = vadd.f32 %v701, 0.0036580483
    %v703 = vmul.f32 %v698, %v702
    %v704 = vadd.f32 %v703, 0.05243302
    %v705 = vmul.f32 %v698, %v704
    %v706 = vadd.f32 %v705, 0.18741608
    %v707 = vmul.f32 %v698, %v706
    %v708 = vadd.f32 %v707, 1.1283791
    %v709 = vmul.f32 %v392, %v708
    %v710 = vmul.f32 %v698, 3.8918573e-05
    %v711 = vadd.f32 %v710, 0.001143296
    %v712 = vmul.f32 %v698, %v711
    %v713 = vadd.f32 %v712, 0.014752088
    %v714 = vmul.f32 %v698, %v713
    %v715 = vadd.f32 %v714, 0.112945676
    %v716 = vmul.f32 %v698, %v715
    %v717 = vadd.f32 %v716, 0.4994258
    %v718 = vmul.f32 %v698, %v717
    %v719 = vadd.f32 %v718, 1.0
    %v720 = vrcp.pop %v719
    %v721 = vmul.f32 %v719, %v720
    %v722 = vsub.f32 1.0, %v721
    %v723 = vmul.f32 %v720, %v722
    %v724 = vadd.f32 %v720, %v723
    %vm725 = vweird.f32 %v719
    %vm726 = vweird.f32 %v720
    %vm727 = vmor %vm725, %vm726
    %v728 = vsel %vm727, %v720, %v724
    %v729 = vand.u32 2147483647, %v719
    %vm730 = vcmp.eq.f32.partialorder %v729, 8.507059e+37
    %v731 = vand.u32 %v719, 2147483648
    %v732 = vor.u32 1.1754944e-38, %v731
    %v733 = vsel %vm730, %v732, %v728
    %v734 = vmul.f32 %v709, %v733
    %v735 = vmin.f32 %v734, 1.0
    %v736 = vmax.f32 %v735, -1.0
    %v737 = vmul.f32 %v393, %v393
    %v738 = vmin.f32 16.0, %v737
    %v739 = vmul.f32 %v738, 2.1237322e-06
    %v740 = vadd.f32 %v739, 0.00028619796
    %v741 = vmul.f32 %v738, %v740
    %v742 = vadd.f32 %v741, 0.0036580483
    %v743 = vmul.f32 %v738, %v742
    %v744 = vadd.f32 %v743, 0.05243302
    %v745 = vmul.f32 %v738, %v744
    %v746 = vadd.f32 %v745, 0.18741608
    %v747 = vmul.f32 %v738, %v746
    %v748 = vadd.f32 %v747, 1.1283791
    %v749 = vmul.f32 %v393, %v748
    %v750 = vmul.f32 %v738, 3.8918573e-05
    %v751 = vadd.f32 %v750, 0.001143296
    %v752 = vmul.f32 %v738, %v751
    %v753 = vadd.f32 %v752, 0.014752088
    %v754 = vmul.f32 %v738, %v753
    %v755 = vadd.f32 %v754, 0.112945676
    %v756 = vmul.f32 %v738, %v755
    %v757 = vadd.f32 %v756, 0.4994258
    %v758 = vmul.f32 %v738, %v757
    %v759 = vadd.f32 %v758, 1.0
    %v760 = vrcp.pop %v759
    %v761 = vmul.f32 %v759, %v760
    %v762 = vsub.f32 1.0, %v761
    %v763 = vmul.f32 %v760, %v762
    %v764 = vadd.f32 %v760, %v763
    %vm765 = vweird.f32 %v759
    %vm766 = vweird.f32 %v760
    %vm767 = vmor %vm765, %vm766
    %v768 = vsel %vm767, %v760, %v764
    %v769 = vand.u32 2147483647, %v759
    %vm770 = vcmp.eq.f32.partialorder %v769, 8.507059e+37
    %v771 = vand.u32 %v759, 2147483648
    %v772 = vor.u32 1.1754944e-38, %v771
    %v773 = vsel %vm770, %v772, %v768
    %v774 = vmul.f32 %v749, %v773
    %v775 = vmin.f32 %v774, 1.0
    %v776 = vmax.f32 %v775, -1.0
    %v777 = vmul.f32 %v394, %v394
    %v778 = vmin.f32 16.0, %v777
    %v779 = vmul.f32 %v778, 2.1237322e-06
    %v780 = vadd.f32 %v779, 0.00028619796
    %v781 = vmul.f32 %v778, %v780
    %v782 = vadd.f32 %v781, 0.0036580483
    %v783 = vmul.f32 %v778, %v782
    %v784 = vadd.f32 %v783, 0.05243302
    %v785 = vmul.f32 %v778, %v784
    %v786 = vadd.f32 %v785, 0.18741608
    %v787 = vmul.f32 %v778, %v786
    %v788 = vadd.f32 %v787, 1.1283791
    %v789 = vmul.f32 %v394, %v788
    %v790 = vmul.f32 %v778, 3.8918573e-05
    %v791 = vadd.f32 %v790, 0.001143296
    %v792 = vmul.f32 %v778, %v791
    %v793 = vadd.f32 %v792, 0.014752088
    %v794 = vmul.f32 %v778, %v793
    %v795 = vadd.f32 %v794, 0.112945676
    %v796 = vmul.f32 %v778, %v795
    %v797 = vadd.f32 %v796, 0.4994258
    %v798 = vmul.f32 %v778, %v797
    %v799 = vadd.f32 %v798, 1.0
    %v800 = vrcp.pop %v799
    %v801 = vmul.f32 %v799, %v800
    %v802 = vsub.f32 1.0, %v801
    %v803 = vmul.f32 %v800, %v802
    %v804 = vadd.f32 %v800, %v803
    %vm805 = vweird.f32 %v799
    %vm806 = vweird.f32 %v800
    %vm807 = vmor %vm805, %vm806
    %v808 = vsel %vm807, %v800, %v804
    %v809 = vand.u32 2147483647, %v799
    %vm810 = vcmp.eq.f32.partialorder %v809, 8.507059e+37
    %v811 = vand.u32 %v799, 2147483648
    %v812 = vor.u32 1.1754944e-38, %v811
    %v813 = vsel %vm810, %v812, %v808
    %v814 = vmul.f32 %v789, %v813
    %v815 = vmin.f32 %v814, 1.0
    %v816 = vmax.f32 %v815, -1.0
    %v817 = vmul.f32 %v395, %v395
    %v818 = vmin.f32 16.0, %v817
    %v819 = vmul.f32 %v818, 2.1237322e-06
    %v820 = vadd.f32 %v819, 0.00028619796
    %v821 = vmul.f32 %v818, %v820
    %v822 = vadd.f32 %v821, 0.0036580483
    %v823 = vmul.f32 %v818, %v822
    %v824 = vadd.f32 %v823, 0.05243302
    %v825 = vmul.f32 %v818, %v824
    %v826 = vadd.f32 %v825, 0.18741608
    %v827 = vmul.f32 %v818, %v826
    %v828 = vadd.f32 %v827, 1.1283791
    %v829 = vmul.f32 %v395, %v828
    %v830 = vmul.f32 %v818, 3.8918573e-05
    %v831 = vadd.f32 %v830, 0.001143296
    %v832 = vmul.f32 %v818, %v831
    %v833 = vadd.f32 %v832, 0.014752088
    %v834 = vmul.f32 %v818, %v833
    %v835 = vadd.f32 %v834, 0.112945676
    %v836 = vmul.f32 %v818, %v835
    %v837 = vadd.f32 %v836, 0.4994258
    %v838 = vmul.f32 %v818, %v837
    %v839 = vadd.f32 %v838, 1.0
    %v840 = vrcp.pop %v839
    %v841 = vmul.f32 %v839, %v840
    %v842 = vsub.f32 1.0, %v841
    %v843 = vmul.f32 %v840, %v842
    %v844 = vadd.f32 %v840, %v843
    %vm845 = vweird.f32 %v839
    %vm846 = vweird.f32 %v840
    %vm847 = vmor %vm845, %vm846
    %v848 = vsel %vm847, %v840, %v844
    %v849 = vand.u32 2147483647, %v839
    %vm850 = vcmp.eq.f32.partialorder %v849, 8.507059e+37
    %v851 = vand.u32 %v839, 2147483648
    %v852 = vor.u32 1.1754944e-38, %v851
    %v853 = vsel %vm850, %v852, %v848
    %v854 = vmul.f32 %v829, %v853
    %v855 = vmin.f32 %v854, 1.0
    %v856 = vmax.f32 %v855, -1.0
    %v857 = vmul.f32 %v396, %v396
    %v858 = vmin.f32 16.0, %v857
    %v859 = vmul.f32 %v858, 2.1237322e-06
    %v860 = vadd.f32 %v859, 0.00028619796
    %v861 = vmul.f32 %v858, %v860
    %v862 = vadd.f32 %v861, 0.0036580483
    %v863 = vmul.f32 %v858, %v862
    %v864 = vadd.f32 %v863, 0.05243302
    %v865 = vmul.f32 %v858, %v864
    %v866 = vadd.f32 %v865, 0.18741608
    %v867 = vmul.f32 %v858, %v866
    %v868 = vadd.f32 %v867, 1.1283791
    %v869 = vmul.f32 %v396, %v868
    %v870 = vmul.f32 %v858, 3.8918573e-05
    %v871 = vadd.f32 %v870, 0.001143296
    %v872 = vmul.f32 %v858, %v871
    %v873 = vadd.f32 %v872, 0.014752088
    %v874 = vmul.f32 %v858, %v873
    %v875 = vadd.f32 %v874, 0.112945676
    %v876 = vmul.f32 %v858, %v875
    %v877 = vadd.f32 %v876, 0.4994258
    %v878 = vmul.f32 %v858, %v877
    %v879 = vadd.f32 %v878, 1.0
    %v880 = vrcp.pop %v879
    %v881 = vmul.f32 %v879, %v880
    %v882 = vsub.f32 1.0, %v881
    %v883 = vmul.f32 %v880, %v882
    %v884 = vadd.f32 %v880, %v883
    %vm885 = vweird.f32 %v879
    %vm886 = vweird.f32 %v880
    %vm887 = vmor %vm885, %vm886
    %v888 = vsel %vm887, %v880, %v884
    %v889 = vand.u32 2147483647, %v879
    %vm890 = vcmp.eq.f32.partialorder %v889, 8.507059e+37
    %v891 = vand.u32 %v879, 2147483648
    %v892 = vor.u32 1.1754944e-38, %v891
    %v893 = vsel %vm890, %v892, %v888
    %v894 = vmul.f32 %v869, %v893
    %v895 = vmin.f32 %v894, 1.0
    %v896 = vmax.f32 %v895, -1.0
    %v897 = vmul.f32 %v397, %v397
    %v898 = vmin.f32 16.0, %v897
    %v899 = vmul.f32 %v898, 2.1237322e-06
    %v900 = vadd.f32 %v899, 0.00028619796
    %v901 = vmul.f32 %v898, %v900
    %v902 = vadd.f32 %v901, 0.0036580483
    %v903 = vmul.f32 %v898, %v902
    %v904 = vadd.f32 %v903, 0.05243302
    %v905 = vmul.f32 %v898, %v904
    %v906 = vadd.f32 %v905, 0.18741608
    %v907 = vmul.f32 %v898, %v906
    %v908 = vadd.f32 %v907, 1.1283791
    %v909 = vmul.f32 %v397, %v908
    %v910 = vmul.f32 %v898, 3.8918573e-05
    %v911 = vadd.f32 %v910, 0.001143296
    %v912 = vmul.f32 %v898, %v911
    %v913 = vadd.f32 %v912, 0.014752088
    %v914 = vmul.f32 %v898, %v913
    %v915 = vadd.f32 %v914, 0.112945676
    %v916 = vmul.f32 %v898, %v915
    %v917 = vadd.f32 %v916, 0.4994258
    %v918 = vmul.f32 %v898, %v917
    %v919 = vadd.f32 %v918, 1.0
    %v920 = vrcp.pop %v919
    %v921 = vmul.f32 %v919, %v920
    %v922 = vsub.f32 1.0, %v921
    %v923 = vmul.f32 %v920, %v922
    %v924 = vadd.f32 %v920, %v923
    %vm925 = vweird.f32 %v919
    %vm926 = vweird.f32 %v920
    %vm927 = vmor %vm925, %vm926
    %v928 = vsel %vm927, %v920, %v924
    %v929 = vand.u32 2147483647, %v919
    %vm930 = vcmp.eq.f32.partialorder %v929, 8.507059e+37
    %v931 = vand.u32 %v919, 2147483648
    %v932 = vor.u32 1.1754944e-38, %v931
    %v933 = vsel %vm930, %v932, %v928
    %v934 = vmul.f32 %v909, %v933
    %v935 = vmin.f32 %v934, 1.0
    %v936 = vmax.f32 %v935, -1.0
    %v937 = vmul.f32 %v398, %v398
    %v938 = vmin.f32 16.0, %v937
    %v939 = vmul.f32 %v938, 2.1237322e-06
    %v940 = vadd.f32 %v939, 0.00028619796
    %v941 = vmul.f32 %v938, %v940
    %v942 = vadd.f32 %v941, 0.0036580483
    %v943 = vmul.f32 %v938, %v942
    %v944 = vadd.f32 %v943, 0.05243302
    %v945 = vmul.f32 %v938, %v944
    %v946 = vadd.f32 %v945, 0.18741608
    %v947 = vmul.f32 %v938, %v946
    %v948 = vadd.f32 %v947, 1.1283791
    %v949 = vmul.f32 %v398, %v948
    %v950 = vmul.f32 %v938, 3.8918573e-05
    %v951 = vadd.f32 %v950, 0.001143296
    %v952 = vmul.f32 %v938, %v951
    %v953 = vadd.f32 %v952, 0.014752088
    %v954 = vmul.f32 %v938, %v953
    %v955 = vadd.f32 %v954, 0.112945676
    %v956 = vmul.f32 %v938, %v955
    %v957 = vadd.f32 %v956, 0.4994258
    %v958 = vmul.f32 %v938, %v957
    %v959 = vadd.f32 %v958, 1.0
    %v960 = vrcp.pop %v959
    %v961 = vmul.f32 %v959, %v960
    %v962 = vsub.f32 1.0, %v961
    %v963 = vmul.f32 %v960, %v962
    %v964 = vadd.f32 %v960, %v963
    %vm965 = vweird.f32 %v959
    %vm966 = vweird.f32 %v960
    %vm967 = vmor %vm965, %vm966
    %v968 = vsel %vm967, %v960, %v964
    %v969 = vand.u32 2147483647, %v959
    %vm970 = vcmp.eq.f32.partialorder %v969, 8.507059e+37
    %v971 = vand.u32 %v959, 2147483648
    %v972 = vor.u32 1.1754944e-38, %v971
    %v973 = vsel %vm970, %v972, %v968
    %v974 = vmul.f32 %v949, %v973
    %v975 = vmin.f32 %v974, 1.0
    %v976 = vmax.f32 %v975, -1.0
    %v977 = vmul.f32 %v399, %v399
    %v978 = vmin.f32 16.0, %v977
    %v979 = vmul.f32 %v978, 2.1237322e-06
    %v980 = vadd.f32 %v979, 0.00028619796
    %v981 = vmul.f32 %v978, %v980
    %v982 = vadd.f32 %v981, 0.0036580483
    %v983 = vmul.f32 %v978, %v982
    %v984 = vadd.f32 %v983, 0.05243302
    %v985 = vmul.f32 %v978, %v984
    %v986 = vadd.f32 %v985, 0.18741608
    %v987 = vmul.f32 %v978, %v986
    %v988 = vadd.f32 %v987, 1.1283791
    %v989 = vmul.f32 %v399, %v988
    %v990 = vmul.f32 %v978, 3.8918573e-05
    %v991 = vadd.f32 %v990, 0.001143296
    %v992 = vmul.f32 %v978, %v991
    %v993 = vadd.f32 %v992, 0.014752088
    %v994 = vmul.f32 %v978, %v993
    %v995 = vadd.f32 %v994, 0.112945676
    %v996 = vmul.f32 %v978, %v995
    %v997 = vadd.f32 %v996, 0.4994258
    %v998 = vmul.f32 %v978, %v997
    %v999 = vadd.f32 %v998, 1.0
    %v1000 = vrcp.pop %v999
    %v1001 = vmul.f32 %v999, %v1000
    %v1002 = vsub.f32 1.0, %v1001
    %v1003 = vmul.f32 %v1000, %v1002
    %v1004 = vadd.f32 %v1000, %v1003
    %vm1005 = vweird.f32 %v999
    %vm1006 = vweird.f32 %v1000
    %vm1007 = vmor %vm1005, %vm1006
    %v1008 = vsel %vm1007, %v1000, %v1004
    %v1009 = vand.u32 2147483647, %v999
    %vm1010 = vcmp.eq.f32.partialorder %v1009, 8.507059e+37
    %v1011 = vand.u32 %v999, 2147483648
    %v1012 = vor.u32 1.1754944e-38, %v1011
    %v1013 = vsel %vm1010, %v1012, %v1008
    %v1014 = vmul.f32 %v989, %v1013
    %v1015 = vmin.f32 %v1014, 1.0
    %v1016 = vmax.f32 %v1015, -1.0
    %v1017 = vmul.f32 %v400, %v400
    %v1018 = vmin.f32 16.0, %v1017
    %v1019 = vmul.f32 %v1018, 2.1237322e-06
    %v1020 = vadd.f32 %v1019, 0.00028619796
    %v1021 = vmul.f32 %v1018, %v1020
    %v1022 = vadd.f32 %v1021, 0.0036580483
    %v1023 = vmul.f32 %v1018, %v1022
    %v1024 = vadd.f32 %v1023, 0.05243302
    %v1025 = vmul.f32 %v1018, %v1024
    %v1026 = vadd.f32 %v1025, 0.18741608
    %v1027 = vmul.f32 %v1018, %v1026
    %v1028 = vadd.f32 %v1027, 1.1283791
    %v1029 = vmul.f32 %v400, %v1028
    %v1030 = vmul.f32 %v1018, 3.8918573e-05
    %v1031 = vadd.f32 %v1030, 0.001143296
    %v1032 = vmul.f32 %v1018, %v1031
    %v1033 = vadd.f32 %v1032, 0.014752088
    %v1034 = vmul.f32 %v1018, %v1033
    %v1035 = vadd.f32 %v1034, 0.112945676
    %v1036 = vmul.f32 %v1018, %v1035
    %v1037 = vadd.f32 %v1036, 0.4994258
    %v1038 = vmul.f32 %v1018, %v1037
    %v1039 = vadd.f32 %v1038, 1.0
    %v1040 = vrcp.pop %v1039
    %v1041 = vmul.f32 %v1039, %v1040
    %v1042 = vsub.f32 1.0, %v1041
    %v1043 = vmul.f32 %v1040, %v1042
    %v1044 = vadd.f32 %v1040, %v1043
    %vm1045 = vweird.f32 %v1039
    %vm1046 = vweird.f32 %v1040
    %vm1047 = vmor %vm1045, %vm1046
    %v1048 = vsel %vm1047, %v1040, %v1044
    %v1049 = vand.u32 2147483647, %v1039
    %vm1050 = vcmp.eq.f32.partialorder %v1049, 8.507059e+37
    %v1051 = vand.u32 %v1039, 2147483648
    %v1052 = vor.u32 1.1754944e-38, %v1051
    %v1053 = vsel %vm1050, %v1052, %v1048
    %v1054 = vmul.f32 %v1029, %v1053
    %v1055 = vmin.f32 %v1054, 1.0
    %v1056 = vmax.f32 %v1055, -1.0
    %v1057 = vmul.f32 %v401, %v401
    %v1058 = vmin.f32 16.0, %v1057
    %v1059 = vmul.f32 %v1058, 2.1237322e-06
    %v1060 = vadd.f32 %v1059, 0.00028619796
    %v1061 = vmul.f32 %v1058, %v1060
    %v1062 = vadd.f32 %v1061, 0.0036580483
    %v1063 = vmul.f32 %v1058, %v1062
    %v1064 = vadd.f32 %v1063, 0.05243302
    %v1065 = vmul.f32 %v1058, %v1064
    %v1066 = vadd.f32 %v1065, 0.18741608
    %v1067 = vmul.f32 %v1058, %v1066
    %v1068 = vadd.f32 %v1067, 1.1283791
    %v1069 = vmul.f32 %v401, %v1068
    %v1070 = vmul.f32 %v1058, 3.8918573e-05
    %v1071 = vadd.f32 %v1070, 0.001143296
    %v1072 = vmul.f32 %v1058, %v1071
    %v1073 = vadd.f32 %v1072, 0.014752088
    %v1074 = vmul.f32 %v1058, %v1073
    %v1075 = vadd.f32 %v1074, 0.112945676
    %v1076 = vmul.f32 %v1058, %v1075
    %v1077 = vadd.f32 %v1076, 0.4994258
    %v1078 = vmul.f32 %v1058, %v1077
    %v1079 = vadd.f32 %v1078, 1.0
    %v1080 = vrcp.pop %v1079
    %v1081 = vmul.f32 %v1079, %v1080
    %v1082 = vsub.f32 1.0, %v1081
    %v1083 = vmul.f32 %v1080, %v1082
    %v1084 = vadd.f32 %v1080, %v1083
    %vm1085 = vweird.f32 %v1079
    %vm1086 = vweird.f32 %v1080
    %vm1087 = vmor %vm1085, %vm1086
    %v1088 = vsel %vm1087, %v1080, %v1084
    %v1089 = vand.u32 2147483647, %v1079
    %vm1090 = vcmp.eq.f32.partialorder %v1089, 8.507059e+37
    %v1091 = vand.u32 %v1079, 2147483648
    %v1092 = vor.u32 1.1754944e-38, %v1091
    %v1093 = vsel %vm1090, %v1092, %v1088
    %v1094 = vmul.f32 %v1069, %v1093
    %v1095 = vmin.f32 %v1094, 1.0
    %v1096 = vmax.f32 %v1095, -1.0
    %v1097 = vmul.f32 %v402, %v402
    %v1098 = vmin.f32 16.0, %v1097
    %v1099 = vmul.f32 %v1098, 2.1237322e-06
    %v1100 = vadd.f32 %v1099, 0.00028619796
    %v1101 = vmul.f32 %v1098, %v1100
    %v1102 = vadd.f32 %v1101, 0.0036580483
    %v1103 = vmul.f32 %v1098, %v1102
    %v1104 = vadd.f32 %v1103, 0.05243302
    %v1105 = vmul.f32 %v1098, %v1104
    %v1106 = vadd.f32 %v1105, 0.18741608
    %v1107 = vmul.f32 %v1098, %v1106
    %v1108 = vadd.f32 %v1107, 1.1283791
    %v1109 = vmul.f32 %v402, %v1108
    %v1110 = vmul.f32 %v1098, 3.8918573e-05
    %v1111 = vadd.f32 %v1110, 0.001143296
    %v1112 = vmul.f32 %v1098, %v1111
    %v1113 = vadd.f32 %v1112, 0.014752088
    %v1114 = vmul.f32 %v1098, %v1113
    %v1115 = vadd.f32 %v1114, 0.112945676
    %v1116 = vmul.f32 %v1098, %v1115
    %v1117 = vadd.f32 %v1116, 0.4994258
    %v1118 = vmul.f32 %v1098, %v1117
    %v1119 = vadd.f32 %v1118, 1.0
    %v1120 = vrcp.pop %v1119
    %v1121 = vmul.f32 %v1119, %v1120
    %v1122 = vsub.f32 1.0, %v1121
    %v1123 = vmul.f32 %v1120, %v1122
    %v1124 = vadd.f32 %v1120, %v1123
    %vm1125 = vweird.f32 %v1119
    %vm1126 = vweird.f32 %v1120
    %vm1127 = vmor %vm1125, %vm1126
    %v1128 = vsel %vm1127, %v1120, %v1124
    %v1129 = vand.u32 2147483647, %v1119
    %vm1130 = vcmp.eq.f32.partialorder %v1129, 8.507059e+37
    %v1131 = vand.u32 %v1119, 2147483648
    %v1132 = vor.u32 1.1754944e-38, %v1131
    %v1133 = vsel %vm1130, %v1132, %v1128
    %v1134 = vmul.f32 %v1109, %v1133
    %v1135 = vmin.f32 %v1134, 1.0
    %v1136 = vmax.f32 %v1135, -1.0
    %v1137 = vmul.f32 %v403, %v403
    %v1138 = vmin.f32 16.0, %v1137
    %v1139 = vmul.f32 %v1138, 2.1237322e-06
    %v1140 = vadd.f32 %v1139, 0.00028619796
    %v1141 = vmul.f32 %v1138, %v1140
    %v1142 = vadd.f32 %v1141, 0.0036580483
    %v1143 = vmul.f32 %v1138, %v1142
    %v1144 = vadd.f32 %v1143, 0.05243302
    %v1145 = vmul.f32 %v1138, %v1144
    %v1146 = vadd.f32 %v1145, 0.18741608
    %v1147 = vmul.f32 %v1138, %v1146
    %v1148 = vadd.f32 %v1147, 1.1283791
    %v1149 = vmul.f32 %v403, %v1148
    %v1150 = vmul.f32 %v1138, 3.8918573e-05
    %v1151 = vadd.f32 %v1150, 0.001143296
    %v1152 = vmul.f32 %v1138, %v1151
    %v1153 = vadd.f32 %v1152, 0.014752088
    %v1154 = vmul.f32 %v1138, %v1153
    %v1155 = vadd.f32 %v1154, 0.112945676
    %v1156 = vmul.f32 %v1138, %v1155
    %v1157 = vadd.f32 %v1156, 0.4994258
    %v1158 = vmul.f32 %v1138, %v1157
    %v1159 = vadd.f32 %v1158, 1.0
    %v1160 = vrcp.pop %v1159
    %v1161 = vmul.f32 %v1159, %v1160
    %v1162 = vsub.f32 1.0, %v1161
    %v1163 = vmul.f32 %v1160, %v1162
    %v1164 = vadd.f32 %v1160, %v1163
    %vm1165 = vweird.f32 %v1159
    %vm1166 = vweird.f32 %v1160
    %vm1167 = vmor %vm1165, %vm1166
    %v1168 = vsel %vm1167, %v1160, %v1164
    %v1169 = vand.u32 2147483647, %v1159
    %vm1170 = vcmp.eq.f32.partialorder %v1169, 8.507059e+37
    %v1171 = vand.u32 %v1159, 2147483648
    %v1172 = vor.u32 1.1754944e-38, %v1171
    %v1173 = vsel %vm1170, %v1172, %v1168
    %v1174 = vmul.f32 %v1149, %v1173
    %v1175 = vmin.f32 %v1174, 1.0
    %v1176 = vmax.f32 %v1175, -1.0
    %v1177 = vmul.f32 %v404, %v404
    %v1178 = vmin.f32 16.0, %v1177
    %v1179 = vmul.f32 %v1178, 2.1237322e-06
    %v1180 = vadd.f32 %v1179, 0.00028619796
    %v1181 = vmul.f32 %v1178, %v1180
    %v1182 = vadd.f32 %v1181, 0.0036580483
    %v1183 = vmul.f32 %v1178, %v1182
    %v1184 = vadd.f32 %v1183, 0.05243302
    %v1185 = vmul.f32 %v1178, %v1184
    %v1186 = vadd.f32 %v1185, 0.18741608
    %v1187 = vmul.f32 %v1178, %v1186
    %v1188 = vadd.f32 %v1187, 1.1283791
    %v1189 = vmul.f32 %v404, %v1188
    %v1190 = vmul.f32 %v1178, 3.8918573e-05
    %v1191 = vadd.f32 %v1190, 0.001143296
    %v1192 = vmul.f32 %v1178, %v1191
    %v1193 = vadd.f32 %v1192, 0.014752088
    %v1194 = vmul.f32 %v1178, %v1193
    %v1195 = vadd.f32 %v1194, 0.112945676
    %v1196 = vmul.f32 %v1178, %v1195
    %v1197 = vadd.f32 %v1196, 0.4994258
    %v1198 = vmul.f32 %v1178, %v1197
    %v1199 = vadd.f32 %v1198, 1.0
    %v1200 = vrcp.pop %v1199
    %v1201 = vmul.f32 %v1199, %v1200
    %v1202 = vsub.f32 1.0, %v1201
    %v1203 = vmul.f32 %v1200, %v1202
    %v1204 = vadd.f32 %v1200, %v1203
    %vm1205 = vweird.f32 %v1199
    %vm1206 = vweird.f32 %v1200
    %vm1207 = vmor %vm1205, %vm1206
    %v1208 = vsel %vm1207, %v1200, %v1204
    %v1209 = vand.u32 2147483647, %v1199
    %vm1210 = vcmp.eq.f32.partialorder %v1209, 8.507059e+37
    %v1211 = vand.u32 %v1199, 2147483648
    %v1212 = vor.u32 1.1754944e-38, %v1211
    %v1213 = vsel %vm1210, %v1212, %v1208
    %v1214 = vmul.f32 %v1189, %v1213
    %v1215 = vmin.f32 %v1214, 1.0
    %v1216 = vmax.f32 %v1215, -1.0
    %v1217 = vmul.f32 %v405, %v405
    %v1218 = vmin.f32 16.0, %v1217
    %v1219 = vmul.f32 %v1218, 2.1237322e-06
    %v1220 = vadd.f32 %v1219, 0.00028619796
    %v1221 = vmul.f32 %v1218, %v1220
    %v1222 = vadd.f32 %v1221, 0.0036580483
    %v1223 = vmul.f32 %v1218, %v1222
    %v1224 = vadd.f32 %v1223, 0.05243302
    %v1225 = vmul.f32 %v1218, %v1224
    %v1226 = vadd.f32 %v1225, 0.18741608
    %v1227 = vmul.f32 %v1218, %v1226
    %v1228 = vadd.f32 %v1227, 1.1283791
    %v1229 = vmul.f32 %v405, %v1228
    %v1230 = vmul.f32 %v1218, 3.8918573e-05
    %v1231 = vadd.f32 %v1230, 0.001143296
    %v1232 = vmul.f32 %v1218, %v1231
    %v1233 = vadd.f32 %v1232, 0.014752088
    %v1234 = vmul.f32 %v1218, %v1233
    %v1235 = vadd.f32 %v1234, 0.112945676
    %v1236 = vmul.f32 %v1218, %v1235
    %v1237 = vadd.f32 %v1236, 0.4994258
    %v1238 = vmul.f32 %v1218, %v1237
    %v1239 = vadd.f32 %v1238, 1.0
    %v1240 = vrcp.pop %v1239
    %v1241 = vmul.f32 %v1239, %v1240
    %v1242 = vsub.f32 1.0, %v1241
    %v1243 = vmul.f32 %v1240, %v1242
    %v1244 = vadd.f32 %v1240, %v1243
    %vm1245 = vweird.f32 %v1239
    %vm1246 = vweird.f32 %v1240
    %vm1247 = vmor %vm1245, %vm1246
    %v1248 = vsel %vm1247, %v1240, %v1244
    %v1249 = vand.u32 2147483647, %v1239
    %vm1250 = vcmp.eq.f32.partialorder %v1249, 8.507059e+37
    %v1251 = vand.u32 %v1239, 2147483648
    %v1252 = vor.u32 1.1754944e-38, %v1251
    %v1253 = vsel %vm1250, %v1252, %v1248
    %v1254 = vmul.f32 %v1229, %v1253
    %v1255 = vmin.f32 %v1254, 1.0
    %v1256 = vmax.f32 %v1255, -1.0
    %v1257 = vmul.f32 %v406, %v406
    %v1258 = vmin.f32 16.0, %v1257
    %v1259 = vmul.f32 %v1258, 2.1237322e-06
    %v1260 = vadd.f32 %v1259, 0.00028619796
    %v1261 = vmul.f32 %v1258, %v1260
    %v1262 = vadd.f32 %v1261, 0.0036580483
    %v1263 = vmul.f32 %v1258, %v1262
    %v1264 = vadd.f32 %v1263, 0.05243302
    %v1265 = vmul.f32 %v1258, %v1264
    %v1266 = vadd.f32 %v1265, 0.18741608
    %v1267 = vmul.f32 %v1258, %v1266
    %v1268 = vadd.f32 %v1267, 1.1283791
    %v1269 = vmul.f32 %v406, %v1268
    %v1270 = vmul.f32 %v1258, 3.8918573e-05
    %v1271 = vadd.f32 %v1270, 0.001143296
    %v1272 = vmul.f32 %v1258, %v1271
    %v1273 = vadd.f32 %v1272, 0.014752088
    %v1274 = vmul.f32 %v1258, %v1273
    %v1275 = vadd.f32 %v1274, 0.112945676
    %v1276 = vmul.f32 %v1258, %v1275
    %v1277 = vadd.f32 %v1276, 0.4994258
    %v1278 = vmul.f32 %v1258, %v1277
    %v1279 = vadd.f32 %v1278, 1.0
    %v1280 = vrcp.pop %v1279
    %v1281 = vmul.f32 %v1279, %v1280
    %v1282 = vsub.f32 1.0, %v1281
    %v1283 = vmul.f32 %v1280, %v1282
    %v1284 = vadd.f32 %v1280, %v1283
    %vm1285 = vweird.f32 %v1279
    %vm1286 = vweird.f32 %v1280
    %vm1287 = vmor %vm1285, %vm1286
    %v1288 = vsel %vm1287, %v1280, %v1284
    %v1289 = vand.u32 2147483647, %v1279
    %vm1290 = vcmp.eq.f32.partialorder %v1289, 8.507059e+37
    %v1291 = vand.u32 %v1279, 2147483648
    %v1292 = vor.u32 1.1754944e-38, %v1291
    %v1293 = vsel %vm1290, %v1292, %v1288
    %v1294 = vmul.f32 %v1269, %v1293
    %v1295 = vmin.f32 %v1294, 1.0
    %v1296 = vmax.f32 %v1295, -1.0
    %v1297 = vmul.f32 %v407, %v407
    %v1298 = vmin.f32 16.0, %v1297
    %v1299 = vmul.f32 %v1298, 2.1237322e-06
    %v1300 = vadd.f32 %v1299, 0.00028619796
    %v1301 = vmul.f32 %v1298, %v1300
    %v1302 = vadd.f32 %v1301, 0.0036580483
    %v1303 = vmul.f32 %v1298, %v1302
    %v1304 = vadd.f32 %v1303, 0.05243302
    %v1305 = vmul.f32 %v1298, %v1304
    %v1306 = vadd.f32 %v1305, 0.18741608
    %v1307 = vmul.f32 %v1298, %v1306
    %v1308 = vadd.f32 %v1307, 1.1283791
    %v1309 = vmul.f32 %v407, %v1308
    %v1310 = vmul.f32 %v1298, 3.8918573e-05
    %v1311 = vadd.f32 %v1310, 0.001143296
    %v1312 = vmul.f32 %v1298, %v1311
    %v1313 = vadd.f32 %v1312, 0.014752088
    %v1314 = vmul.f32 %v1298, %v1313
    %v1315 = vadd.f32 %v1314, 0.112945676
    %v1316 = vmul.f32 %v1298, %v1315
    %v1317 = vadd.f32 %v1316, 0.4994258
    %v1318 = vmul.f32 %v1298, %v1317
    %v1319 = vadd.f32 %v1318, 1.0
    %v1320 = vrcp.pop %v1319
    %v1321 = vmul.f32 %v1319, %v1320
    %v1322 = vsub.f32 1.0, %v1321
    %v1323 = vmul.f32 %v1320, %v1322
    %v1324 = vadd.f32 %v1320, %v1323
    %vm1325 = vweird.f32 %v1319
    %vm1326 = vweird.f32 %v1320
    %vm1327 = vmor %vm1325, %vm1326
    %v1328 = vsel %vm1327, %v1320, %v1324
    %v1329 = vand.u32 2147483647, %v1319
    %vm1330 = vcmp.eq.f32.partialorder %v1329, 8.507059e+37
    %v1331 = vand.u32 %v1319, 2147483648
    %v1332 = vor.u32 1.1754944e-38, %v1331
    %v1333 = vsel %vm1330, %v1332, %v1328
    %v1334 = vmul.f32 %v1309, %v1333
    %v1335 = vmin.f32 %v1334, 1.0
    %v1336 = vmax.f32 %v1335, -1.0
    %v1337 = vmul.f32 %v408, %v408
    %v1338 = vmin.f32 16.0, %v1337
    %v1339 = vmul.f32 %v1338, 2.1237322e-06
    %v1340 = vadd.f32 %v1339, 0.00028619796
    %v1341 = vmul.f32 %v1338, %v1340
    %v1342 = vadd.f32 %v1341, 0.0036580483
    %v1343 = vmul.f32 %v1338, %v1342
    %v1344 = vadd.f32 %v1343, 0.05243302
    %v1345 = vmul.f32 %v1338, %v1344
    %v1346 = vadd.f32 %v1345, 0.18741608
    %v1347 = vmul.f32 %v1338, %v1346
    %v1348 = vadd.f32 %v1347, 1.1283791
    %v1349 = vmul.f32 %v408, %v1348
    %v1350 = vmul.f32 %v1338, 3.8918573e-05
    %v1351 = vadd.f32 %v1350, 0.001143296
    %v1352 = vmul.f32 %v1338, %v1351
    %v1353 = vadd.f32 %v1352, 0.014752088
    %v1354 = vmul.f32 %v1338, %v1353
    %v1355 = vadd.f32 %v1354, 0.112945676
    %v1356 = vmul.f32 %v1338, %v1355
    %v1357 = vadd.f32 %v1356, 0.4994258
    %v1358 = vmul.f32 %v1338, %v1357
    %v1359 = vadd.f32 %v1358, 1.0
    %v1360 = vrcp.pop %v1359
    %v1361 = vmul.f32 %v1359, %v1360
    %v1362 = vsub.f32 1.0, %v1361
    %v1363 = vmul.f32 %v1360, %v1362
    %v1364 = vadd.f32 %v1360, %v1363
    %vm1365 = vweird.f32 %v1359
    %vm1366 = vweird.f32 %v1360
    %vm1367 = vmor %vm1365, %vm1366
    %v1368 = vsel %vm1367, %v1360, %v1364
    %v1369 = vand.u32 2147483647, %v1359
    %vm1370 = vcmp.eq.f32.partialorder %v1369, 8.507059e+37
    %v1371 = vand.u32 %v1359, 2147483648
    %v1372 = vor.u32 1.1754944e-38, %v1371
    %v1373 = vsel %vm1370, %v1372, %v1368
    %v1374 = vmul.f32 %v1349, %v1373
    %v1375 = vmin.f32 %v1374, 1.0
    %v1376 = vmax.f32 %v1375, -1.0
    %v1377 = vmul.f32 %v409, %v409
    %v1378 = vmin.f32 16.0, %v1377
    %v1379 = vmul.f32 %v1378, 2.1237322e-06
    %v1380 = vadd.f32 %v1379, 0.00028619796
    %v1381 = vmul.f32 %v1378, %v1380
    %v1382 = vadd.f32 %v1381, 0.0036580483
    %v1383 = vmul.f32 %v1378, %v1382
    %v1384 = vadd.f32 %v1383, 0.05243302
    %v1385 = vmul.f32 %v1378, %v1384
    %v1386 = vadd.f32 %v1385, 0.18741608
    %v1387 = vmul.f32 %v1378, %v1386
    %v1388 = vadd.f32 %v1387, 1.1283791
    %v1389 = vmul.f32 %v409, %v1388
    %v1390 = vmul.f32 %v1378, 3.8918573e-05
    %v1391 = vadd.f32 %v1390, 0.001143296
    %v1392 = vmul.f32 %v1378, %v1391
    %v1393 = vadd.f32 %v1392, 0.014752088
    %v1394 = vmul.f32 %v1378, %v1393
    %v1395 = vadd.f32 %v1394, 0.112945676
    %v1396 = vmul.f32 %v1378, %v1395
    %v1397 = vadd.f32 %v1396, 0.4994258
    %v1398 = vmul.f32 %v1378, %v1397
    %v1399 = vadd.f32 %v1398, 1.0
    %v1400 = vrcp.pop %v1399
    %v1401 = vmul.f32 %v1399, %v1400
    %v1402 = vsub.f32 1.0, %v1401
    %v1403 = vmul.f32 %v1400, %v1402
    %v1404 = vadd.f32 %v1400, %v1403
    %vm1405 = vweird.f32 %v1399
    %vm1406 = vweird.f32 %v1400
    %vm1407 = vmor %vm1405, %vm1406
    %v1408 = vsel %vm1407, %v1400, %v1404
    %v1409 = vand.u32 2147483647, %v1399
    %vm1410 = vcmp.eq.f32.partialorder %v1409, 8.507059e+37
    %v1411 = vand.u32 %v1399, 2147483648
    %v1412 = vor.u32 1.1754944e-38, %v1411
    %v1413 = vsel %vm1410, %v1412, %v1408
    %v1414 = vmul.f32 %v1389, %v1413
    %v1415 = vmin.f32 %v1414, 1.0
    %v1416 = vmax.f32 %v1415, -1.0
    %v1417 = vmul.f32 %v410, %v410
    %v1418 = vmin.f32 16.0, %v1417
    %v1419 = vmul.f32 %v1418, 2.1237322e-06
    %v1420 = vadd.f32 %v1419, 0.00028619796
    %v1421 = vmul.f32 %v1418, %v1420
    %v1422 = vadd.f32 %v1421, 0.0036580483
    %v1423 = vmul.f32 %v1418, %v1422
    %v1424 = vadd.f32 %v1423, 0.05243302
    %v1425 = vmul.f32 %v1418, %v1424
    %v1426 = vadd.f32 %v1425, 0.18741608
    %v1427 = vmul.f32 %v1418, %v1426
    %v1428 = vadd.f32 %v1427, 1.1283791
    %v1429 = vmul.f32 %v410, %v1428
    %v1430 = vmul.f32 %v1418, 3.8918573e-05
    %v1431 = vadd.f32 %v1430, 0.001143296
    %v1432 = vmul.f32 %v1418, %v1431
    %v1433 = vadd.f32 %v1432, 0.014752088
    %v1434 = vmul.f32 %v1418, %v1433
    %v1435 = vadd.f32 %v1434, 0.112945676
    %v1436 = vmul.f32 %v1418, %v1435
    %v1437 = vadd.f32 %v1436, 0.4994258
    %v1438 = vmul.f32 %v1418, %v1437
    %v1439 = vadd.f32 %v1438, 1.0
    %v1440 = vrcp.pop %v1439
    %v1441 = vmul.f32 %v1439, %v1440
    %v1442 = vsub.f32 1.0, %v1441
    %v1443 = vmul.f32 %v1440, %v1442
    %v1444 = vadd.f32 %v1440, %v1443
    %vm1445 = vweird.f32 %v1439
    %vm1446 = vweird.f32 %v1440
    %vm1447 = vmor %vm1445, %vm1446
    %v1448 = vsel %vm1447, %v1440, %v1444
    %v1449 = vand.u32 2147483647, %v1439
    %vm1450 = vcmp.eq.f32.partialorder %v1449, 8.507059e+37
    %v1451 = vand.u32 %v1439, 2147483648
    %v1452 = vor.u32 1.1754944e-38, %v1451
    %v1453 = vsel %vm1450, %v1452, %v1448
    %v1454 = vmul.f32 %v1429, %v1453
    %v1455 = vmin.f32 %v1454, 1.0
    %v1456 = vmax.f32 %v1455, -1.0
    %v1457 = vmul.f32 %v411, %v411
    %v1458 = vmin.f32 16.0, %v1457
    %v1459 = vmul.f32 %v1458, 2.1237322e-06
    %v1460 = vadd.f32 %v1459, 0.00028619796
    %v1461 = vmul.f32 %v1458, %v1460
    %v1462 = vadd.f32 %v1461, 0.0036580483
    %v1463 = vmul.f32 %v1458, %v1462
    %v1464 = vadd.f32 %v1463, 0.05243302
    %v1465 = vmul.f32 %v1458, %v1464
    %v1466 = vadd.f32 %v1465, 0.18741608
    %v1467 = vmul.f32 %v1458, %v1466
    %v1468 = vadd.f32 %v1467, 1.1283791
    %v1469 = vmul.f32 %v411, %v1468
    %v1470 = vmul.f32 %v1458, 3.8918573e-05
    %v1471 = vadd.f32 %v1470, 0.001143296
    %v1472 = vmul.f32 %v1458, %v1471
    %v1473 = vadd.f32 %v1472, 0.014752088
    %v1474 = vmul.f32 %v1458, %v1473
    %v1475 = vadd.f32 %v1474, 0.112945676
    %v1476 = vmul.f32 %v1458, %v1475
    %v1477 = vadd.f32 %v1476, 0.4994258
    %v1478 = vmul.f32 %v1458, %v1477
    %v1479 = vadd.f32 %v1478, 1.0
    %v1480 = vrcp.pop %v1479
    %v1481 = vmul.f32 %v1479, %v1480
    %v1482 = vsub.f32 1.0, %v1481
    %v1483 = vmul.f32 %v1480, %v1482
    %v1484 = vadd.f32 %v1480, %v1483
    %vm1485 = vweird.f32 %v1479
    %vm1486 = vweird.f32 %v1480
    %vm1487 = vmor %vm1485, %vm1486
    %v1488 = vsel %vm1487, %v1480, %v1484
    %v1489 = vand.u32 2147483647, %v1479
    %vm1490 = vcmp.eq.f32.partialorder %v1489, 8.507059e+37
    %v1491 = vand.u32 %v1479, 2147483648
    %v1492 = vor.u32 1.1754944e-38, %v1491
    %v1493 = vsel %vm1490, %v1492, %v1488
    %v1494 = vmul.f32 %v1469, %v1493
    %v1495 = vmin.f32 %v1494, 1.0
    %v1496 = vmax.f32 %v1495, -1.0
    %v1497 = vmul.f32 %v412, %v412
    %v1498 = vmin.f32 16.0, %v1497
    %v1499 = vmul.f32 %v1498, 2.1237322e-06
    %v1500 = vadd.f32 %v1499, 0.00028619796
    %v1501 = vmul.f32 %v1498, %v1500
    %v1502 = vadd.f32 %v1501, 0.0036580483
    %v1503 = vmul.f32 %v1498, %v1502
    %v1504 = vadd.f32 %v1503, 0.05243302
    %v1505 = vmul.f32 %v1498, %v1504
    %v1506 = vadd.f32 %v1505, 0.18741608
    %v1507 = vmul.f32 %v1498, %v1506
    %v1508 = vadd.f32 %v1507, 1.1283791
    %v1509 = vmul.f32 %v412, %v1508
    %v1510 = vmul.f32 %v1498, 3.8918573e-05
    %v1511 = vadd.f32 %v1510, 0.001143296
    %v1512 = vmul.f32 %v1498, %v1511
    %v1513 = vadd.f32 %v1512, 0.014752088
    %v1514 = vmul.f32 %v1498, %v1513
    %v1515 = vadd.f32 %v1514, 0.112945676
    %v1516 = vmul.f32 %v1498, %v1515
    %v1517 = vadd.f32 %v1516, 0.4994258
    %v1518 = vmul.f32 %v1498, %v1517
    %v1519 = vadd.f32 %v1518, 1.0
    %v1520 = vrcp.pop %v1519
    %v1521 = vmul.f32 %v1519, %v1520
    %v1522 = vsub.f32 1.0, %v1521
    %v1523 = vmul.f32 %v1520, %v1522
    %v1524 = vadd.f32 %v1520, %v1523
    %vm1525 = vweird.f32 %v1519
    %vm1526 = vweird.f32 %v1520
    %vm1527 = vmor %vm1525, %vm1526
    %v1528 = vsel %vm1527, %v1520, %v1524
    %v1529 = vand.u32 2147483647, %v1519
    %vm1530 = vcmp.eq.f32.partialorder %v1529, 8.507059e+37
    %v1531 = vand.u32 %v1519, 2147483648
    %v1532 = vor.u32 1.1754944e-38, %v1531
    %v1533 = vsel %vm1530, %v1532, %v1528
    %v1534 = vmul.f32 %v1509, %v1533
    %v1535 = vmin.f32 %v1534, 1.0
    %v1536 = vmax.f32 %v1535, -1.0
    %v1537 = vmul.f32 %v413, %v413
    %v1538 = vmin.f32 16.0, %v1537
    %v1539 = vmul.f32 %v1538, 2.1237322e-06
    %v1540 = vadd.f32 %v1539, 0.00028619796
    %v1541 = vmul.f32 %v1538, %v1540
    %v1542 = vadd.f32 %v1541, 0.0036580483
    %v1543 = vmul.f32 %v1538, %v1542
    %v1544 = vadd.f32 %v1543, 0.05243302
    %v1545 = vmul.f32 %v1538, %v1544
    %v1546 = vadd.f32 %v1545, 0.18741608
    %v1547 = vmul.f32 %v1538, %v1546
    %v1548 = vadd.f32 %v1547, 1.1283791
    %v1549 = vmul.f32 %v413, %v1548
    %v1550 = vmul.f32 %v1538, 3.8918573e-05
    %v1551 = vadd.f32 %v1550, 0.001143296
    %v1552 = vmul.f32 %v1538, %v1551
    %v1553 = vadd.f32 %v1552, 0.014752088
    %v1554 = vmul.f32 %v1538, %v1553
    %v1555 = vadd.f32 %v1554, 0.112945676
    %v1556 = vmul.f32 %v1538, %v1555
    %v1557 = vadd.f32 %v1556, 0.4994258
    %v1558 = vmul.f32 %v1538, %v1557
    %v1559 = vadd.f32 %v1558, 1.0
    %v1560 = vrcp.pop %v1559
    %v1561 = vmul.f32 %v1559, %v1560
    %v1562 = vsub.f32 1.0, %v1561
    %v1563 = vmul.f32 %v1560, %v1562
    %v1564 = vadd.f32 %v1560, %v1563
    %vm1565 = vweird.f32 %v1559
    %vm1566 = vweird.f32 %v1560
    %vm1567 = vmor %vm1565, %vm1566
    %v1568 = vsel %vm1567, %v1560, %v1564
    %v1569 = vand.u32 2147483647, %v1559
    %vm1570 = vcmp.eq.f32.partialorder %v1569, 8.507059e+37
    %v1571 = vand.u32 %v1559, 2147483648
    %v1572 = vor.u32 1.1754944e-38, %v1571
    %v1573 = vsel %vm1570, %v1572, %v1568
    %v1574 = vmul.f32 %v1549, %v1573
    %v1575 = vmin.f32 %v1574, 1.0
    %v1576 = vmax.f32 %v1575, -1.0
    %v1577 = vmul.f32 %v414, %v414
    %v1578 = vmin.f32 16.0, %v1577
    %v1579 = vmul.f32 %v1578, 2.1237322e-06
    %v1580 = vadd.f32 %v1579, 0.00028619796
    %v1581 = vmul.f32 %v1578, %v1580
    %v1582 = vadd.f32 %v1581, 0.0036580483
    %v1583 = vmul.f32 %v1578, %v1582
    %v1584 = vadd.f32 %v1583, 0.05243302
    %v1585 = vmul.f32 %v1578, %v1584
    %v1586 = vadd.f32 %v1585, 0.18741608
    %v1587 = vmul.f32 %v1578, %v1586
    %v1588 = vadd.f32 %v1587, 1.1283791
    %v1589 = vmul.f32 %v414, %v1588
    %v1590 = vmul.f32 %v1578, 3.8918573e-05
    %v1591 = vadd.f32 %v1590, 0.001143296
    %v1592 = vmul.f32 %v1578, %v1591
    %v1593 = vadd.f32 %v1592, 0.014752088
    %v1594 = vmul.f32 %v1578, %v1593
    %v1595 = vadd.f32 %v1594, 0.112945676
    %v1596 = vmul.f32 %v1578, %v1595
    %v1597 = vadd.f32 %v1596, 0.4994258
    %v1598 = vmul.f32 %v1578, %v1597
    %v1599 = vadd.f32 %v1598, 1.0
    %v1600 = vrcp.pop %v1599
    %v1601 = vmul.f32 %v1599, %v1600
    %v1602 = vsub.f32 1.0, %v1601
    %v1603 = vmul.f32 %v1600, %v1602
    %v1604 = vadd.f32 %v1600, %v1603
    %vm1605 = vweird.f32 %v1599
    %vm1606 = vweird.f32 %v1600
    %vm1607 = vmor %vm1605, %vm1606
    %v1608 = vsel %vm1607, %v1600, %v1604
    %v1609 = vand.u32 2147483647, %v1599
    %vm1610 = vcmp.eq.f32.partialorder %v1609, 8.507059e+37
    %v1611 = vand.u32 %v1599, 2147483648
    %v1612 = vor.u32 1.1754944e-38, %v1611
    %v1613 = vsel %vm1610, %v1612, %v1608
    %v1614 = vmul.f32 %v1589, %v1613
    %v1615 = vmin.f32 %v1614, 1.0
    %v1616 = vmax.f32 %v1615, -1.0
    %v1617 = vmul.f32 %v415, %v415
    %v1618 = vmin.f32 16.0, %v1617
    %v1619 = vmul.f32 %v1618, 2.1237322e-06
    %v1620 = vadd.f32 %v1619, 0.00028619796
    %v1621 = vmul.f32 %v1618, %v1620
    %v1622 = vadd.f32 %v1621, 0.0036580483
    %v1623 = vmul.f32 %v1618, %v1622
    %v1624 = vadd.f32 %v1623, 0.05243302
    %v1625 = vmul.f32 %v1618, %v1624
    %v1626 = vadd.f32 %v1625, 0.18741608
    %v1627 = vmul.f32 %v1618, %v1626
    %v1628 = vadd.f32 %v1627, 1.1283791
    %v1629 = vmul.f32 %v415, %v1628
    %v1630 = vmul.f32 %v1618, 3.8918573e-05
    %v1631 = vadd.f32 %v1630, 0.001143296
    %v1632 = vmul.f32 %v1618, %v1631
    %v1633 = vadd.f32 %v1632, 0.014752088
    %v1634 = vmul.f32 %v1618, %v1633
    %v1635 = vadd.f32 %v1634, 0.112945676
    %v1636 = vmul.f32 %v1618, %v1635
    %v1637 = vadd.f32 %v1636, 0.4994258
    %v1638 = vmul.f32 %v1618, %v1637
    %v1639 = vadd.f32 %v1638, 1.0
    %v1640 = vrcp.pop %v1639
    %v1641 = vmul.f32 %v1639, %v1640
    %v1642 = vsub.f32 1.0, %v1641
    %v1643 = vmul.f32 %v1640, %v1642
    %v1644 = vadd.f32 %v1640, %v1643
    %vm1645 = vweird.f32 %v1639
    %vm1646 = vweird.f32 %v1640
    %vm1647 = vmor %vm1645, %vm1646
    %v1648 = vsel %vm1647, %v1640, %v1644
    %v1649 = vand.u32 2147483647, %v1639
    %vm1650 = vcmp.eq.f32.partialorder %v1649, 8.507059e+37
    %v1651 = vand.u32 %v1639, 2147483648
    %v1652 = vor.u32 1.1754944e-38, %v1651
    %v1653 = vsel %vm1650, %v1652, %v1648
    %v1654 = vmul.f32 %v1629, %v1653
    %v1655 = vmin.f32 %v1654, 1.0
    %v1656 = vmax.f32 %v1655, -1.0
    %v1657 = vmul.f32 %v416, %v416
    %v1658 = vmin.f32 16.0, %v1657
    %v1659 = vmul.f32 %v1658, 2.1237322e-06
    %v1660 = vadd.f32 %v1659, 0.00028619796
    %v1661 = vmul.f32 %v1658, %v1660
    %v1662 = vadd.f32 %v1661, 0.0036580483
    %v1663 = vmul.f32 %v1658, %v1662
    %v1664 = vadd.f32 %v1663, 0.05243302
    %v1665 = vmul.f32 %v1658, %v1664
    %v1666 = vadd.f32 %v1665, 0.18741608
    %v1667 = vmul.f32 %v1658, %v1666
    %v1668 = vadd.f32 %v1667, 1.1283791
    %v1669 = vmul.f32 %v416, %v1668
    %v1670 = vmul.f32 %v1658, 3.8918573e-05
    %v1671 = vadd.f32 %v1670, 0.001143296
    %v1672 = vmul.f32 %v1658, %v1671
    %v1673 = vadd.f32 %v1672, 0.014752088
    %v1674 = vmul.f32 %v1658, %v1673
    %v1675 = vadd.f32 %v1674, 0.112945676
    %v1676 = vmul.f32 %v1658, %v1675
    %v1677 = vadd.f32 %v1676, 0.4994258
    %v1678 = vmul.f32 %v1658, %v1677
    %v1679 = vadd.f32 %v1678, 1.0
    %v1680 = vrcp.pop %v1679
    %v1681 = vmul.f32 %v1679, %v1680
    %v1682 = vsub.f32 1.0, %v1681
    %v1683 = vmul.f32 %v1680, %v1682
    %v1684 = vadd.f32 %v1680, %v1683
    %vm1685 = vweird.f32 %v1679
    %vm1686 = vweird.f32 %v1680
    %vm1687 = vmor %vm1685, %vm1686
    %v1688 = vsel %vm1687, %v1680, %v1684
    %v1689 = vand.u32 2147483647, %v1679
    %vm1690 = vcmp.eq.f32.partialorder %v1689, 8.507059e+37
    %v1691 = vand.u32 %v1679, 2147483648
    %v1692 = vor.u32 1.1754944e-38, %v1691
    %v1693 = vsel %vm1690, %v1692, %v1688
    %v1694 = vmul.f32 %v1669, %v1693
    %v1695 = vmin.f32 %v1694, 1.0
    %v1696 = vmax.f32 %v1695, -1.0
    %v1697 = vadd.f32 %v456, 1.0
    %v1698 = vadd.f32 %v496, 1.0
    %v1699 = vadd.f32 %v536, 1.0
    %v1700 = vadd.f32 %v576, 1.0
    %v1701 = vadd.f32 %v616, 1.0
    %v1702 = vadd.f32 %v656, 1.0
    %v1703 = vadd.f32 %v696, 1.0
    %v1704 = vadd.f32 %v736, 1.0
    %v1705 = vadd.f32 %v776, 1.0
    %v1706 = vadd.f32 %v816, 1.0
    %v1707 = vadd.f32 %v856, 1.0
    %v1708 = vadd.f32 %v896, 1.0
    %v1709 = vadd.f32 %v936, 1.0
    %v1710 = vadd.f32 %v976, 1.0
    %v1711 = vadd.f32 %v1016, 1.0
    %v1712 = vadd.f32 %v1056, 1.0
    %v1713 = vadd.f32 %v1096, 1.0
    %v1714 = vadd.f32 %v1136, 1.0
    %v1715 = vadd.f32 %v1176, 1.0
    %v1716 = vadd.f32 %v1216, 1.0
    %v1717 = vadd.f32 %v1256, 1.0
    %v1718 = vadd.f32 %v1296, 1.0
    %v1719 = vadd.f32 %v1336, 1.0
    %v1720 = vadd.f32 %v1376, 1.0
    %v1721 = vadd.f32 %v1416, 1.0
    %v1722 = vadd.f32 %v1456, 1.0
    %v1723 = vadd.f32 %v1496, 1.0
    %v1724 = vadd.f32 %v1536, 1.0
    %v1725 = vadd.f32 %v1576, 1.0
    %v1726 = vadd.f32 %v1616, 1.0
    %v1727 = vadd.f32 %v1656, 1.0
    %v1728 = vadd.f32 %v1696, 1.0
    %v1729 = vmul.f32 %v353, %v1697
    %v1730 = vmul.f32 %v354, %v1698
    %v1731 = vmul.f32 %v355, %v1699
    %v1732 = vmul.f32 %v356, %v1700
    %v1733 = vmul.f32 %v357, %v1701
    %v1734 = vmul.f32 %v358, %v1702
    %v1735 = vmul.f32 %v359, %v1703
    %v1736 = vmul.f32 %v360, %v1704
    %v1737 = vmul.f32 %v361, %v1705
    %v1738 = vmul.f32 %v362, %v1706
    %v1739 = vmul.f32 %v363, %v1707
    %v1740 = vmul.f32 %v364, %v1708
    %v1741 = vmul.f32 %v365, %v1709
    %v1742 = vmul.f32 %v366, %v1710
    %v1743 = vmul.f32 %v367, %v1711
    %v1744 = vmul.f32 %v368, %v1712
    %v1745 = vmul.f32 %v369, %v1713
    %v1746 = vmul.f32 %v370, %v1714
    %v1747 = vmul.f32 %v371, %v1715
    %v1748 = vmul.f32 %v372, %v1716
    %v1749 = vmul.f32 %v373, %v1717
    %v1750 = vmul.f32 %v374, %v1718
    %v1751 = vmul.f32 %v375, %v1719
    %v1752 = vmul.f32 %v376, %v1720
    %v1753 = vmul.f32 %v377, %v1721
    %v1754 = vmul.f32 %v378, %v1722
    %v1755 = vmul.f32 %v379, %v1723
    %v1756 = vmul.f32 %v380, %v1724
    %v1757 = vmul.f32 %v381, %v1725
    %v1758 = vmul.f32 %v382, %v1726
    %v1759 = vmul.f32 %v383, %v1727
    %v1760 = vmul.f32 %v384, %v1728
    %v1761 = vpack.c.bf16 %v1730, %v1729
    %v1762 = vpack.c.bf16 %v1732, %v1731
    %v1763 = vpack.c.bf16 %v1734, %v1733
    %v1764 = vpack.c.bf16 %v1736, %v1735
    %v1765 = vpack.c.bf16 %v1738, %v1737
    %v1766 = vpack.c.bf16 %v1740, %v1739
    %v1767 = vpack.c.bf16 %v1742, %v1741
    %v1768 = vpack.c.bf16 %v1744, %v1743
    %v1769 = vpack.c.bf16 %v1746, %v1745
    %v1770 = vpack.c.bf16 %v1748, %v1747
    %v1771 = vpack.c.bf16 %v1750, %v1749
    %v1772 = vpack.c.bf16 %v1752, %v1751
    %v1773 = vpack.c.bf16 %v1754, %v1753
    %v1774 = vpack.c.bf16 %v1756, %v1755
    %v1775 = vpack.c.bf16 %v1758, %v1757
    %v1776 = vpack.c.bf16 %v1760, %v1759
    %v1777 = vld [vmem:[#allocation7] sm:$0xf]
    %v1778 = vld [vmem:[#allocation7 + $0x4] sm:$0xf]
    %v1779 = vld [vmem:[#allocation7 + $0x8] sm:$0xf]
    %v1780 = vld [vmem:[#allocation7 + $0xc] sm:$0xf]
    %v1781 = vld [vmem:[#allocation7 + $0x10] sm:$0xf]
    %v1782 = vld [vmem:[#allocation7 + $0x14] sm:$0xf]
    %v1783 = vld [vmem:[#allocation7 + $0x18] sm:$0xf]
    %v1784 = vld [vmem:[#allocation7 + $0x1c] sm:$0xf]
    %v1785 = vld [vmem:[#allocation7 + $0x20] sm:$0xf]
    %v1786 = vld [vmem:[#allocation7 + $0x24] sm:$0xf]
    %v1787 = vld [vmem:[#allocation7 + $0x28] sm:$0xf]
    %v1788 = vld [vmem:[#allocation7 + $0x2c] sm:$0xf]
    %v1789 = vld [vmem:[#allocation7 + $0x30] sm:$0xf]
    %v1790 = vld [vmem:[#allocation7 + $0x34] sm:$0xf]
    %v1791 = vld [vmem:[#allocation7 + $0x38] sm:$0xf]
    %v1792 = vld [vmem:[#allocation7 + $0x3c] sm:$0xf]
    %v1793 = vld [vmem:[%s4] sm:$0x1]
    %v1795 = vperm.slane %v1793, 0
    %v1813 = vunpack.c.l.b16 %v1777
    %v1814 = vunpack.c.l.b16 %v1778
    %v1815 = vunpack.c.l.b16 %v1779
    %v1816 = vunpack.c.l.b16 %v1780
    %v1817 = vunpack.c.l.b16 %v1781
    %v1818 = vunpack.c.l.b16 %v1782
    %v1819 = vunpack.c.l.b16 %v1783
    %v1820 = vunpack.c.l.b16 %v1784
    %v1821 = vunpack.c.l.b16 %v1785
    %v1822 = vunpack.c.l.b16 %v1786
    %v1823 = vunpack.c.l.b16 %v1787
    %v1824 = vunpack.c.l.b16 %v1788
    %v1825 = vunpack.c.l.b16 %v1789
    %v1826 = vunpack.c.l.b16 %v1790
    %v1827 = vunpack.c.l.b16 %v1791
    %v1828 = vunpack.c.l.b16 %v1792
    %v1829 = vpack.c.b16 %v1814, %v1813
    %v1830 = vpack.c.b16 %v1816, %v1815
    %v1831 = vpack.c.b16 %v1818, %v1817
    %v1832 = vpack.c.b16 %v1820, %v1819
    %v1833 = vpack.c.b16 %v1822, %v1821
    %v1834 = vpack.c.b16 %v1824, %v1823
    %v1835 = vpack.c.b16 %v1826, %v1825
    %v1836 = vpack.c.b16 %v1828, %v1827
    %1845 = vmatpush.bf16.msra.mxu0 %v1836
    %1846 = vmatpush.bf16.msra.mxu0 %v1835
    %1847 = vmatpush.bf16.msra.mxu0 %v1834
    %1848 = vmatpush.bf16.msra.mxu0 %v1833
    %1849 = vmatpush.bf16.msra.mxu0 %v1832
    %1850 = vmatpush.bf16.msra.mxu0 %v1831
    %1851 = vmatpush.bf16.msra.mxu0 %v1830
    %1852 = vmatpush.bf16.msra.mxu0 %v1829
    %1853 = vmatmul.bf16.gmra.mxu0 %v1761
    %v1854 = vpop.f32.mrf.mxu0
    %v1855 = vadd.f32 %v1795, %v1854
    %v1856 = vpop.f32.mrf.mxu0
    %v1857 = vadd.f32 %v1795, %v1856
    %1858 = vmatmul.bf16.gmra.mxu0 %v1762
    %v1859 = vpop.f32.mrf.mxu0
    %v1860 = vadd.f32 %v1795, %v1859
    %v1861 = vpop.f32.mrf.mxu0
    %v1862 = vadd.f32 %v1795, %v1861
    %1863 = vmatmul.bf16.gmra.mxu0 %v1763
    %v1864 = vpop.f32.mrf.mxu0
    %v1865 = vadd.f32 %v1795, %v1864
    %v1866 = vpop.f32.mrf.mxu0
    %v1867 = vadd.f32 %v1795, %v1866
    %1868 = vmatmul.bf16.gmra.mxu0 %v1764
    %v1869 = vpop.f32.mrf.mxu0
    %v1870 = vadd.f32 %v1795, %v1869
    %v1871 = vpop.f32.mrf.mxu0
    %v1872 = vadd.f32 %v1795, %v1871
    %1873 = vmatmul.bf16.gmra.mxu0 %v1765
    %v1874 = vpop.f32.mrf.mxu0
    %v1875 = vadd.f32 %v1795, %v1874
    %v1876 = vpop.f32.mrf.mxu0
    %v1877 = vadd.f32 %v1795, %v1876
    %1878 = vmatmul.bf16.gmra.mxu0 %v1766
    %v1879 = vpop.f32.mrf.mxu0
    %v1880 = vadd.f32 %v1795, %v1879
    %v1881 = vpop.f32.mrf.mxu0
    %v1882 = vadd.f32 %v1795, %v1881
    %1883 = vmatmul.bf16.gmra.mxu0 %v1767
    %v1884 = vpop.f32.mrf.mxu0
    %v1885 = vadd.f32 %v1795, %v1884
    %v1886 = vpop.f32.mrf.mxu0
    %v1887 = vadd.f32 %v1795, %v1886
    %1888 = vmatmul.bf16.gmra.mxu0 %v1768
    %v1889 = vpop.f32.mrf.mxu0
    %v1890 = vadd.f32 %v1795, %v1889
    %v1891 = vpop.f32.mrf.mxu0
    %v1892 = vadd.f32 %v1795, %v1891
    %1893 = vmatmul.bf16.gmra.mxu0 %v1769
    %v1894 = vpop.f32.mrf.mxu0
    %v1895 = vadd.f32 %v1795, %v1894
    %v1896 = vpop.f32.mrf.mxu0
    %v1897 = vadd.f32 %v1795, %v1896
    %1898 = vmatmul.bf16.gmra.mxu0 %v1770
    %v1899 = vpop.f32.mrf.mxu0
    %v1900 = vadd.f32 %v1795, %v1899
    %v1901 = vpop.f32.mrf.mxu0
    %v1902 = vadd.f32 %v1795, %v1901
    %1903 = vmatmul.bf16.gmra.mxu0 %v1771
    %v1904 = vpop.f32.mrf.mxu0
    %v1905 = vadd.f32 %v1795, %v1904
    %v1906 = vpop.f32.mrf.mxu0
    %v1907 = vadd.f32 %v1795, %v1906
    %1908 = vmatmul.bf16.gmra.mxu0 %v1772
    %v1909 = vpop.f32.mrf.mxu0
    %v1910 = vadd.f32 %v1795, %v1909
    %v1911 = vpop.f32.mrf.mxu0
    %v1912 = vadd.f32 %v1795, %v1911
    %1913 = vmatmul.bf16.gmra.mxu0 %v1773
    %v1914 = vpop.f32.mrf.mxu0
    %v1915 = vadd.f32 %v1795, %v1914
    %v1916 = vpop.f32.mrf.mxu0
    %v1917 = vadd.f32 %v1795, %v1916
    %1918 = vmatmul.bf16.gmra.mxu0 %v1774
    %v1919 = vpop.f32.mrf.mxu0
    %v1920 = vadd.f32 %v1795, %v1919
    %v1921 = vpop.f32.mrf.mxu0
    %v1922 = vadd.f32 %v1795, %v1921
    %1923 = vmatmul.bf16.gmra.mxu0 %v1775
    %v1924 = vpop.f32.mrf.mxu0
    %v1925 = vadd.f32 %v1795, %v1924
    %v1926 = vpop.f32.mrf.mxu0
    %v1927 = vadd.f32 %v1795, %v1926
    %1928 = vmatmul.bf16.gmra.mxu0 %v1776
    %v1929 = vpop.f32.mrf.mxu0
    %v1930 = vadd.f32 %v1795, %v1929
    %v1931 = vpop.f32.mrf.mxu0
    %v1932 = vadd.f32 %v1795, %v1931
    %1933 = vdwg.mxu0
    %1934 = vst [vmem:[#allocation8] sm:$0xff] %v1855
    %1935 = vst [vmem:[#allocation8 + $0x8] sm:$0xff] %v1857
    %1936 = vst [vmem:[#allocation8 + $0x10] sm:$0xff] %v1860
    %1937 = vst [vmem:[#allocation8 + $0x18] sm:$0xff] %v1862
    %1938 = vst [vmem:[#allocation8 + $0x20] sm:$0xff] %v1865
    %1939 = vst [vmem:[#allocation8 + $0x28] sm:$0xff] %v1867
    %1940 = vst [vmem:[#allocation8 + $0x30] sm:$0xff] %v1870
    %1941 = vst [vmem:[#allocation8 + $0x38] sm:$0xff] %v1872
    %1942 = vst [vmem:[#allocation8 + $0x40] sm:$0xff] %v1875
    %1943 = vst [vmem:[#allocation8 + $0x48] sm:$0xff] %v1877
    %1944 = vst [vmem:[#allocation8 + $0x50] sm:$0xff] %v1880
    %1945 = vst [vmem:[#allocation8 + $0x58] sm:$0xff] %v1882
    %1946 = vst [vmem:[#allocation8 + $0x60] sm:$0xff] %v1885
    %1947 = vst [vmem:[#allocation8 + $0x68] sm:$0xff] %v1887
    %1948 = vst [vmem:[#allocation8 + $0x70] sm:$0xff] %v1890
    %1949 = vst [vmem:[#allocation8 + $0x78] sm:$0xff] %v1892
    %1950 = vst [vmem:[#allocation8 + $0x80] sm:$0xff] %v1895
    %1951 = vst [vmem:[#allocation8 + $0x88] sm:$0xff] %v1897
    %1952 = vst [vmem:[#allocation8 + $0x90] sm:$0xff] %v1900
    %1953 = vst [vmem:[#allocation8 + $0x98] sm:$0xff] %v1902
    %1954 = vst [vmem:[#allocation8 + $0xa0] sm:$0xff] %v1905
    %1955 = vst [vmem:[#allocation8 + $0xa8] sm:$0xff] %v1907
    %1956 = vst [vmem:[#allocation8 + $0xb0] sm:$0xff] %v1910
    %1957 = vst [vmem:[#allocation8 + $0xb8] sm:$0xff] %v1912
    %1958 = vst [vmem:[#allocation8 + $0xc0] sm:$0xff] %v1915
    %1959 = vst [vmem:[#allocation8 + $0xc8] sm:$0xff] %v1917
    %1960 = vst [vmem:[#allocation8 + $0xd0] sm:$0xff] %v1920
    %1961 = vst [vmem:[#allocation8 + $0xd8] sm:$0xff] %v1922
    %1962 = vst [vmem:[#allocation8 + $0xe0] sm:$0xff] %v1925
    %1963 = vst [vmem:[#allocation8 + $0xe8] sm:$0xff] %v1927
    %1964 = vst [vmem:[#allocation8 + $0xf0] sm:$0xff] %v1930
    %1965 = vst [vmem:[#allocation8 + $0xf8] sm:$0xff] %v1932
    // Predicated region
    $region34: #{tpu_custom_call.1} parent=1 // pred_check
      _
    $region35: #{tpu_custom_call.1} parent=1 // pred_check_branch
      %1967 = sbr.rel (0) target = $region37
    $region36: #{tpu_custom_call.1} parent=1 // pred_region
      %1969 = vsyncadd [#allocation4], 0
      %s1970 = sshll.u32 [#allocation8], 4
      %s1971 = int_to_ptr.vmem [resolvable:$true] %s1970
      %s1972 = sshll.u32 %s5, 4
      %s1973 = int_to_ptr.hbm [resolvable:$true] %s1972
      %1978 = dma.vmem_to_hbm [thread:$0]  %s1971, 4096, %s1973, [#allocation4], 128, 128, 8
    $region37: #{tpu_custom_call.1} parent=1 // pred_fallthru
      _
    // Predicated region
    $region38: #{tpu_custom_call.1} parent=1 // pred_check
      _
    $region39: #{tpu_custom_call.1} parent=1 // pred_check_branch
      %1980 = sbr.rel (0) target = $region41
    $region40: #{tpu_custom_call.1} parent=1 // pred_region
      %1982 = dma.done [#allocation4], 4096
    $region41: #{tpu_custom_call.1} parent=1 // pred_fallthru
      _
    %1983 = vsyncpa [#allocation3], 1
    %1984 = vsyncpa [#allocation6], 1
    %1985 = vsyncpa [#allocation4], 1

</llo_original>
